<compile_context>
chip_gen: v7x
topology: tpu7x:2x2x1
jax: 0.10.0
libtpu: 0.0.40
codegen_flags: <defaults>
</compile_context>

<pallas_src>
import functools

import jax
import jax.numpy as jnp
from jax import lax
from jax.experimental import pallas as pl
from jax.experimental.pallas import tpu as pltpu


def _round_up(x: int, m: int) -> int:
    return (x + m - 1) // m * m


def rnn_kernel(x_ref, h0_ref, wi_ref, bh_ref, wh_ref, wo_ref, bo_ref,
               out_ref, hs_ref, *, seq_len, batch):
    """Single-invocation RNN forward (everything VMEM resident).

    Shapes:
      x_ref  : (S*Bp, E)  bf16  time-major embedded tokens, flattened
      h0_ref : (Bp, H)    f32   initial hidden state
      wi_ref : (E, H)     bf16  input->hidden weight (pre-transposed: x @ W)
      bh_ref : (1, H)     f32   hidden bias (folded into the input projection)
      wh_ref : (H, H)     bf16  hidden->hidden weight
      wo_ref : (H, Vp)    bf16  hidden->output weight (vocab padded to 128)
      bo_ref : (1, Vp)    f32   output bias
      out_ref: (S*Bp, Vp) f32   logits (time-major)
      hs_ref : (S*Bp, H)  bf16  aliased scratch: holds the hoisted input
                                projection, overwritten per step with h_t
    """
    # 1) Hoisted, time-independent input projection (bias folded here), written
    #    directly into the aliased hidden-state scratch as bf16.
    hs_ref[...] = (
        jnp.dot(x_ref[...], wi_ref[...], preferred_element_type=jnp.float32)
        + bh_ref[...]
    ).astype(hs_ref.dtype)

    # 2) Serial recurrence: only h @ W_h2h (+ staged pre-activation) + tanh.
    #    W_h2h is re-read from VMEM each step (cheap vld) instead of being
    #    pinned in 32 vregs across the unrolled loop; the carry h stays f32.
    def step(t, h):
        off = pl.multiple_of(t * batch, batch)
        pre = hs_ref[pl.ds(off, batch), :].astype(jnp.float32) + jnp.dot(
            h.astype(jnp.bfloat16), wh_ref[...],
            preferred_element_type=jnp.float32)
        h_new = jnp.tanh(pre)
        hs_ref[pl.ds(off, batch), :] = h_new.astype(hs_ref.dtype)
        return h_new

    lax.fori_loop(0, seq_len, step, h0_ref[...], unroll=min(seq_len, 8))

    # 3) Hoisted, time-independent output projection: one batched bf16 GEMM,
    #    lane-dense (Vp % 128 == 0) f32 store.
    out_ref[...] = (
        jnp.dot(hs_ref[...], wo_ref[...], preferred_element_type=jnp.float32)
        + bo_ref[...]
    ).astype(out_ref.dtype)


def rnn_forward(x_idx, embed_table, w_i2h, w_h2h, b_h2h, w_h2o, b_h2o, h_0=None):
    """Matches Net.forward: returns logits of shape (B*S, vocab)."""
    B, S = x_idx.shape
    V, E = embed_table.shape
    H = w_h2h.shape[0]

    B_pad = _round_up(B, 16)     # bf16 sublane tile -> aligned per-step slices
    V_pad = _round_up(V, 128)    # lane-dense output / MXU N dim

    # TODO(synk): at realistic vocab/seq, move this gather into the kernel via
    # PrefetchScalarGridSpec (token ids in SMEM) + pl.Element row-gather instead
    # of wrapper jnp.take + transpose + pad.
    x_emb = jnp.take(embed_table.astype(jnp.bfloat16), x_idx, axis=0)   # (B,S,E) bf16
    x_emb = jnp.transpose(x_emb, (1, 0, 2))                             # (S,B,E)
    x_emb = jnp.pad(x_emb, ((0, 0), (0, B_pad - B), (0, 0)))            # (S,Bp,E)
    x2d = x_emb.reshape(S * B_pad, E)                                   # (S*Bp,E)

    if h_0 is None:
        h0 = jnp.zeros((B_pad, H), jnp.float32)
    else:
        h0 = jnp.pad(h_0.astype(jnp.float32), ((0, B_pad - B), (0, 0)))

    wi = w_i2h.astype(jnp.bfloat16)                                     # (E, H)
    wh = w_h2h.astype(jnp.bfloat16)                                     # (H, H)
    wo = jnp.pad(w_h2o, ((0, 0), (0, V_pad - V))).astype(jnp.bfloat16)  # (H, Vp)
    bh = b_h2h.reshape(1, H).astype(jnp.float32)                        # (1, H)
    bo = jnp.pad(b_h2o, ((0, V_pad - V),)).reshape(1, V_pad).astype(jnp.float32)

    kernel = functools.partial(rnn_kernel, seq_len=S, batch=B_pad)

    logits_p = pl.pallas_call(
        kernel,
        out_shape=jax.ShapeDtypeStruct((S * B_pad, V_pad), jnp.float32),
        in_specs=[pl.BlockSpec(memory_space=pltpu.MemorySpace.VMEM)] * 7,
        out_specs=pl.BlockSpec(memory_space=pltpu.MemorySpace.VMEM),
        scratch_shapes=[
            # Aliased buffer: first the input projection, then h_t per step.
            pltpu.VMEM((S * B_pad, H), jnp.bfloat16),
        ],
    )(x2d, h0, wi, bh, wh, wo, bo)

    # (S*Bp, Vp) -> (S, Bp, Vp) -> (B, S, V) -> (B*S, V)
    # TODO(synk): at realistic sizes, have the (gridded, batch-major) output
    # projection write this layout directly instead of a post-kernel transpose.
    logits = logits_p.reshape(S, B_pad, V_pad)
    logits = jnp.transpose(logits, (1, 0, 2))[:B, :, :V]
    return logits.reshape(B * S, V)


def reference_forward(x_idx, embed_table, w_i2h, w_h2h, b_h2h, w_h2o, b_h2o):
    """Pure-f32 JAX reference matching the PyTorch module."""
    B, S = x_idx.shape
    V, _ = embed_table.shape
    H = w_h2h.shape[0]
    h = jnp.zeros((B, H), jnp.float32)
    outs = []
    for t in range(S):
        x_t = jnp.take(embed_table, x_idx[:, t], axis=0)
        h = jnp.tanh(x_t @ w_i2h + h @ w_h2h + b_h2h)
        outs.append(h @ w_h2o + b_h2o)
    return jnp.stack(outs, axis=1).reshape(B * S, V)


if __name__ == "__main__":
    # Shapes consistent with the module: hidden=256, embed=128 are fixed by
    # __init__; seq_len and vocab come from in_shape/out_shape.
    B, S = 2, 8
    V = 32          # vocab_size = out_shape[0]
    H = 256         # hidden_size
    E = 128         # embed_dim

    key = jax.random.PRNGKey(0)
    k_emb, k_wi, k_wh, k_bh, k_wo, k_bo, k_idx = jax.random.split(key, 7)

    # Deterministic synthetic parameters (pre-transposed Linear weights: x @ W).
    embed_table = jax.random.normal(k_emb, (V, E), jnp.float32) * 0.1
    w_i2h = jax.random.normal(k_wi, (E, H), jnp.float32) * 0.05   # i2h (no bias)
    w_h2h = jax.random.normal(k_wh, (H, H), jnp.float32) * 0.05
    b_h2h = jax.random.normal(k_bh, (H,), jnp.float32) * 0.05
    w_h2o = jax.random.normal(k_wo, (H, V), jnp.float32) * 0.05
    b_h2o = jax.random.normal(k_bo, (V,), jnp.float32) * 0.05

    x_idx = jax.random.randint(k_idx, (B, S), 0, V, jnp.int32)

    logits = rnn_forward(x_idx, embed_table, w_i2h, w_h2h, b_h2h, w_h2o, b_h2o)
    logits = jax.block_until_ready(logits)
    assert logits.shape == (B * S, V), logits.shape

    # bf16 storage of weights / embeddings / staged activations (with f32
    # accumulation + f32 recurrence carry) gives ~1e-3-scale deviations from
    # the pure-f32 reference; use a correspondingly relaxed tolerance.
    ref = reference_forward(x_idx, embed_table, w_i2h, w_h2h, b_h2h, w_h2o, b_h2o)
    assert jnp.allclose(logits, ref, atol=2e-2, rtol=2e-2), \
        float(jnp.max(jnp.abs(logits - ref)))

    print("KERNEL_OK")
</pallas_src>

<mosaic_0001>
module attributes {stable_mosaic.version = 11 : i64} {
  func.func @rnn_kernel(%arg0: memref<128x128xbf16, #tpu.memory_space<vmem>>, %arg1: memref<16x256xf32, #tpu.memory_space<vmem>>, %arg2: memref<128x256xbf16, #tpu.memory_space<vmem>>, %arg3: memref<1x256xf32, #tpu.memory_space<vmem>>, %arg4: memref<256x256xbf16, #tpu.memory_space<vmem>>, %arg5: memref<256x128xbf16, #tpu.memory_space<vmem>>, %arg6: memref<1x128xf32, #tpu.memory_space<vmem>>, %arg7: memref<128x128xf32, #tpu.memory_space<vmem>>, %arg8: memref<128x256xbf16, #tpu.memory_space<vmem>>) attributes {dimension_semantics = [], scalar_prefetch = 0 : i64, scratch_operands = 1 : i64, tpu.core_type = #tpu.core_type<tc>} {
    %c0 = arith.constant 0 : index
    %c0_0 = arith.constant 0 : index
    %0 = vector.load %arg0[%c0, %c0_0] : memref<128x128xbf16, #tpu.memory_space<vmem>>, vector<128x128xbf16>
    %c0_1 = arith.constant 0 : index
    %c0_2 = arith.constant 0 : index
    %1 = vector.load %arg2[%c0_1, %c0_2] : memref<128x256xbf16, #tpu.memory_space<vmem>>, vector<128x256xbf16>
    %cst = arith.constant dense<0.000000e+00> : vector<128x256xf32>
    %2 = tpu.matmul %0, %1, %cst {dimension_numbers = #tpu.dot_dimension_numbers<[1], [0], [0], [1], [0, 0, 1, 1], [], []>} : vector<128x128xbf16>, vector<128x256xbf16>, vector<128x256xf32> -> vector<128x256xf32>
    %c0_3 = arith.constant 0 : index
    %c0_4 = arith.constant 0 : index
    %3 = vector.load %arg3[%c0_3, %c0_4] : memref<1x256xf32, #tpu.memory_space<vmem>>, vector<1x256xf32>
    %4 = vector.broadcast %3 : vector<1x256xf32> to vector<128x256xf32>
    %5 = arith.addf %2, %4 : vector<128x256xf32>
    %6 = arith.truncf %5 : vector<128x256xf32> to vector<128x256xbf16>
    %c0_5 = arith.constant 0 : index
    %c0_6 = arith.constant 0 : index
    %7 = vector.load %arg8[%c0_5, %c0_6] : memref<128x256xbf16, #tpu.memory_space<vmem>>, vector<128x256xbf16>
    tpu.vector_store %arg8[%c0_5, %c0_6], %6 {strides = array<i32>} : memref<128x256xbf16, #tpu.memory_space<vmem>>, vector<128x256xbf16>,
    %c0_7 = arith.constant 0 : index
    %c0_8 = arith.constant 0 : index
    %8 = vector.load %arg1[%c0_7, %c0_8] : memref<16x256xf32, #tpu.memory_space<vmem>>, vector<16x256xf32>
    %c0_i32 = arith.constant 0 : i32
    %c16_i32 = arith.constant 16 : i32
    %9 = arith.muli %c0_i32, %c16_i32 : i32
    %10 = tpu.assume_multiple %9, 16 : i32
    %11 = arith.index_cast %10 : i32 to index
    %c0_9 = arith.constant 0 : index
    %12 = vector.load %arg8[%11, %c0_9] : memref<128x256xbf16, #tpu.memory_space<vmem>>, vector<16x256xbf16>
    %13 = arith.extf %12 : vector<16x256xbf16> to vector<16x256xf32>
    %14 = arith.truncf %8 : vector<16x256xf32> to vector<16x256xbf16>
    %c0_10 = arith.constant 0 : index
    %c0_11 = arith.constant 0 : index
    %15 = vector.load %arg4[%c0_10, %c0_11] : memref<256x256xbf16, #tpu.memory_space<vmem>>, vector<256x256xbf16>
    %cst_12 = arith.constant dense<0.000000e+00> : vector<16x256xf32>
    %16 = tpu.matmul %14, %15, %cst_12 {dimension_numbers = #tpu.dot_dimension_numbers<[1], [0], [0], [1], [0, 0, 1, 1], [], []>} : vector<16x256xbf16>, vector<256x256xbf16>, vector<16x256xf32> -> vector<16x256xf32>
    %17 = arith.addf %13, %16 : vector<16x256xf32>
    %18 = math.tanh %17 : vector<16x256xf32>
    %19 = arith.truncf %18 : vector<16x256xf32> to vector<16x256xbf16>
    %20 = arith.index_cast %10 : i32 to index
    %c0_13 = arith.constant 0 : index
    %21 = vector.load %arg8[%20, %c0_13] : memref<128x256xbf16, #tpu.memory_space<vmem>>, vector<16x256xbf16>
    tpu.vector_store %arg8[%20, %c0_13], %19 {strides = array<i32>} : memref<128x256xbf16, #tpu.memory_space<vmem>>, vector<16x256xbf16>,
    %c1_i32 = arith.constant 1 : i32
    %c16_i32_14 = arith.constant 16 : i32
    %22 = arith.muli %c1_i32, %c16_i32_14 : i32
    %23 = tpu.assume_multiple %22, 16 : i32
    %24 = arith.index_cast %23 : i32 to index
    %c0_15 = arith.constant 0 : index
    %25 = vector.load %arg8[%24, %c0_15] : memref<128x256xbf16, #tpu.memory_space<vmem>>, vector<16x256xbf16>
    %26 = arith.extf %25 : vector<16x256xbf16> to vector<16x256xf32>
    %27 = arith.truncf %18 : vector<16x256xf32> to vector<16x256xbf16>
    %c0_16 = arith.constant 0 : index
    %c0_17 = arith.constant 0 : index
    %28 = vector.load %arg4[%c0_16, %c0_17] : memref<256x256xbf16, #tpu.memory_space<vmem>>, vector<256x256xbf16>
    %cst_18 = arith.constant dense<0.000000e+00> : vector<16x256xf32>
    %29 = tpu.matmul %27, %28, %cst_18 {dimension_numbers = #tpu.dot_dimension_numbers<[1], [0], [0], [1], [0, 0, 1, 1], [], []>} : vector<16x256xbf16>, vector<256x256xbf16>, vector<16x256xf32> -> vector<16x256xf32>
    %30 = arith.addf %26, %29 : vector<16x256xf32>
    %31 = math.tanh %30 : vector<16x256xf32>
    %32 = arith.truncf %31 : vector<16x256xf32> to vector<16x256xbf16>
    %33 = arith.index_cast %23 : i32 to index
    %c0_19 = arith.constant 0 : index
    %34 = vector.load %arg8[%33, %c0_19] : memref<128x256xbf16, #tpu.memory_space<vmem>>, vector<16x256xbf16>
    tpu.vector_store %arg8[%33, %c0_19], %32 {strides = array<i32>} : memref<128x256xbf16, #tpu.memory_space<vmem>>, vector<16x256xbf16>,
    %c2_i32 = arith.constant 2 : i32
    %c16_i32_20 = arith.constant 16 : i32
    %35 = arith.muli %c2_i32, %c16_i32_20 : i32
    %36 = tpu.assume_multiple %35, 16 : i32
    %37 = arith.index_cast %36 : i32 to index
    %c0_21 = arith.constant 0 : index
    %38 = vector.load %arg8[%37, %c0_21] : memref<128x256xbf16, #tpu.memory_space<vmem>>, vector<16x256xbf16>
    %39 = arith.extf %38 : vector<16x256xbf16> to vector<16x256xf32>
    %40 = arith.truncf %31 : vector<16x256xf32> to vector<16x256xbf16>
    %c0_22 = arith.constant 0 : index
    %c0_23 = arith.constant 0 : index
    %41 = vector.load %arg4[%c0_22, %c0_23] : memref<256x256xbf16, #tpu.memory_space<vmem>>, vector<256x256xbf16>
    %cst_24 = arith.constant dense<0.000000e+00> : vector<16x256xf32>
    %42 = tpu.matmul %40, %41, %cst_24 {dimension_numbers = #tpu.dot_dimension_numbers<[1], [0], [0], [1], [0, 0, 1, 1], [], []>} : vector<16x256xbf16>, vector<256x256xbf16>, vector<16x256xf32> -> vector<16x256xf32>
    %43 = arith.addf %39, %42 : vector<16x256xf32>
    %44 = math.tanh %43 : vector<16x256xf32>
    %45 = arith.truncf %44 : vector<16x256xf32> to vector<16x256xbf16>
    %46 = arith.index_cast %36 : i32 to index
    %c0_25 = arith.constant 0 : index
    %47 = vector.load %arg8[%46, %c0_25] : memref<128x256xbf16, #tpu.memory_space<vmem>>, vector<16x256xbf16>
    tpu.vector_store %arg8[%46, %c0_25], %45 {strides = array<i32>} : memref<128x256xbf16, #tpu.memory_space<vmem>>, vector<16x256xbf16>,
    %c3_i32 = arith.constant 3 : i32
    %c16_i32_26 = arith.constant 16 : i32
    %48 = arith.muli %c3_i32, %c16_i32_26 : i32
    %49 = tpu.assume_multiple %48, 16 : i32
    %50 = arith.index_cast %49 : i32 to index
    %c0_27 = arith.constant 0 : index
    %51 = vector.load %arg8[%50, %c0_27] : memref<128x256xbf16, #tpu.memory_space<vmem>>, vector<16x256xbf16>
    %52 = arith.extf %51 : vector<16x256xbf16> to vector<16x256xf32>
    %53 = arith.truncf %44 : vector<16x256xf32> to vector<16x256xbf16>
    %c0_28 = arith.constant 0 : index
    %c0_29 = arith.constant 0 : index
    %54 = vector.load %arg4[%c0_28, %c0_29] : memref<256x256xbf16, #tpu.memory_space<vmem>>, vector<256x256xbf16>
    %cst_30 = arith.constant dense<0.000000e+00> : vector<16x256xf32>
    %55 = tpu.matmul %53, %54, %cst_30 {dimension_numbers = #tpu.dot_dimension_numbers<[1], [0], [0], [1], [0, 0, 1, 1], [], []>} : vector<16x256xbf16>, vector<256x256xbf16>, vector<16x256xf32> -> vector<16x256xf32>
    %56 = arith.addf %52, %55 : vector<16x256xf32>
    %57 = math.tanh %56 : vector<16x256xf32>
    %58 = arith.truncf %57 : vector<16x256xf32> to vector<16x256xbf16>
    %59 = arith.index_cast %49 : i32 to index
    %c0_31 = arith.constant 0 : index
    %60 = vector.load %arg8[%59, %c0_31] : memref<128x256xbf16, #tpu.memory_space<vmem>>, vector<16x256xbf16>
    tpu.vector_store %arg8[%59, %c0_31], %58 {strides = array<i32>} : memref<128x256xbf16, #tpu.memory_space<vmem>>, vector<16x256xbf16>,
    %c4_i32 = arith.constant 4 : i32
    %c16_i32_32 = arith.constant 16 : i32
    %61 = arith.muli %c4_i32, %c16_i32_32 : i32
    %62 = tpu.assume_multiple %61, 16 : i32
    %63 = arith.index_cast %62 : i32 to index
    %c0_33 = arith.constant 0 : index
    %64 = vector.load %arg8[%63, %c0_33] : memref<128x256xbf16, #tpu.memory_space<vmem>>, vector<16x256xbf16>
    %65 = arith.extf %64 : vector<16x256xbf16> to vector<16x256xf32>
    %66 = arith.truncf %57 : vector<16x256xf32> to vector<16x256xbf16>
    %c0_34 = arith.constant 0 : index
    %c0_35 = arith.constant 0 : index
    %67 = vector.load %arg4[%c0_34, %c0_35] : memref<256x256xbf16, #tpu.memory_space<vmem>>, vector<256x256xbf16>
    %cst_36 = arith.constant dense<0.000000e+00> : vector<16x256xf32>
    %68 = tpu.matmul %66, %67, %cst_36 {dimension_numbers = #tpu.dot_dimension_numbers<[1], [0], [0], [1], [0, 0, 1, 1], [], []>} : vector<16x256xbf16>, vector<256x256xbf16>, vector<16x256xf32> -> vector<16x256xf32>
    %69 = arith.addf %65, %68 : vector<16x256xf32>
    %70 = math.tanh %69 : vector<16x256xf32>
    %71 = arith.truncf %70 : vector<16x256xf32> to vector<16x256xbf16>
    %72 = arith.index_cast %62 : i32 to index
    %c0_37 = arith.constant 0 : index
    %73 = vector.load %arg8[%72, %c0_37] : memref<128x256xbf16, #tpu.memory_space<vmem>>, vector<16x256xbf16>
    tpu.vector_store %arg8[%72, %c0_37], %71 {strides = array<i32>} : memref<128x256xbf16, #tpu.memory_space<vmem>>, vector<16x256xbf16>,
    %c5_i32 = arith.constant 5 : i32
    %c16_i32_38 = arith.constant 16 : i32
    %74 = arith.muli %c5_i32, %c16_i32_38 : i32
    %75 = tpu.assume_multiple %74, 16 : i32
    %76 = arith.index_cast %75 : i32 to index
    %c0_39 = arith.constant 0 : index
    %77 = vector.load %arg8[%76, %c0_39] : memref<128x256xbf16, #tpu.memory_space<vmem>>, vector<16x256xbf16>
    %78 = arith.extf %77 : vector<16x256xbf16> to vector<16x256xf32>
    %79 = arith.truncf %70 : vector<16x256xf32> to vector<16x256xbf16>
    %c0_40 = arith.constant 0 : index
    %c0_41 = arith.constant 0 : index
    %80 = vector.load %arg4[%c0_40, %c0_41] : memref<256x256xbf16, #tpu.memory_space<vmem>>, vector<256x256xbf16>
    %cst_42 = arith.constant dense<0.000000e+00> : vector<16x256xf32>
    %81 = tpu.matmul %79, %80, %cst_42 {dimension_numbers = #tpu.dot_dimension_numbers<[1], [0], [0], [1], [0, 0, 1, 1], [], []>} : vector<16x256xbf16>, vector<256x256xbf16>, vector<16x256xf32> -> vector<16x256xf32>
    %82 = arith.addf %78, %81 : vector<16x256xf32>
    %83 = math.tanh %82 : vector<16x256xf32>
    %84 = arith.truncf %83 : vector<16x256xf32> to vector<16x256xbf16>
    %85 = arith.index_cast %75 : i32 to index
    %c0_43 = arith.constant 0 : index
    %86 = vector.load %arg8[%85, %c0_43] : memref<128x256xbf16, #tpu.memory_space<vmem>>, vector<16x256xbf16>
    tpu.vector_store %arg8[%85, %c0_43], %84 {strides = array<i32>} : memref<128x256xbf16, #tpu.memory_space<vmem>>, vector<16x256xbf16>,
    %c6_i32 = arith.constant 6 : i32
    %c16_i32_44 = arith.constant 16 : i32
    %87 = arith.muli %c6_i32, %c16_i32_44 : i32
    %88 = tpu.assume_multiple %87, 16 : i32
    %89 = arith.index_cast %88 : i32 to index
    %c0_45 = arith.constant 0 : index
    %90 = vector.load %arg8[%89, %c0_45] : memref<128x256xbf16, #tpu.memory_space<vmem>>, vector<16x256xbf16>
    %91 = arith.extf %90 : vector<16x256xbf16> to vector<16x256xf32>
    %92 = arith.truncf %83 : vector<16x256xf32> to vector<16x256xbf16>
    %c0_46 = arith.constant 0 : index
    %c0_47 = arith.constant 0 : index
    %93 = vector.load %arg4[%c0_46, %c0_47] : memref<256x256xbf16, #tpu.memory_space<vmem>>, vector<256x256xbf16>
    %cst_48 = arith.constant dense<0.000000e+00> : vector<16x256xf32>
    %94 = tpu.matmul %92, %93, %cst_48 {dimension_numbers = #tpu.dot_dimension_numbers<[1], [0], [0], [1], [0, 0, 1, 1], [], []>} : vector<16x256xbf16>, vector<256x256xbf16>, vector<16x256xf32> -> vector<16x256xf32>
    %95 = arith.addf %91, %94 : vector<16x256xf32>
    %96 = math.tanh %95 : vector<16x256xf32>
    %97 = arith.truncf %96 : vector<16x256xf32> to vector<16x256xbf16>
    %98 = arith.index_cast %88 : i32 to index
    %c0_49 = arith.constant 0 : index
    %99 = vector.load %arg8[%98, %c0_49] : memref<128x256xbf16, #tpu.memory_space<vmem>>, vector<16x256xbf16>
    tpu.vector_store %arg8[%98, %c0_49], %97 {strides = array<i32>} : memref<128x256xbf16, #tpu.memory_space<vmem>>, vector<16x256xbf16>,
    %c7_i32 = arith.constant 7 : i32
    %c16_i32_50 = arith.constant 16 : i32
    %100 = arith.muli %c7_i32, %c16_i32_50 : i32
    %101 = tpu.assume_multiple %100, 16 : i32
    %102 = arith.index_cast %101 : i32 to index
    %c0_51 = arith.constant 0 : index
    %103 = vector.load %arg8[%102, %c0_51] : memref<128x256xbf16, #tpu.memory_space<vmem>>, vector<16x256xbf16>
    %104 = arith.extf %103 : vector<16x256xbf16> to vector<16x256xf32>
    %105 = arith.truncf %96 : vector<16x256xf32> to vector<16x256xbf16>
    %c0_52 = arith.constant 0 : index
    %c0_53 = arith.constant 0 : index
    %106 = vector.load %arg4[%c0_52, %c0_53] : memref<256x256xbf16, #tpu.memory_space<vmem>>, vector<256x256xbf16>
    %cst_54 = arith.constant dense<0.000000e+00> : vector<16x256xf32>
    %107 = tpu.matmul %105, %106, %cst_54 {dimension_numbers = #tpu.dot_dimension_numbers<[1], [0], [0], [1], [0, 0, 1, 1], [], []>} : vector<16x256xbf16>, vector<256x256xbf16>, vector<16x256xf32> -> vector<16x256xf32>
    %108 = arith.addf %104, %107 : vector<16x256xf32>
    %109 = math.tanh %108 : vector<16x256xf32>
    %110 = arith.truncf %109 : vector<16x256xf32> to vector<16x256xbf16>
    %111 = arith.index_cast %101 : i32 to index
    %c0_55 = arith.constant 0 : index
    %112 = vector.load %arg8[%111, %c0_55] : memref<128x256xbf16, #tpu.memory_space<vmem>>, vector<16x256xbf16>
    tpu.vector_store %arg8[%111, %c0_55], %110 {strides = array<i32>} : memref<128x256xbf16, #tpu.memory_space<vmem>>, vector<16x256xbf16>,
    %c8_i32 = arith.constant 8 : i32
    %c0_56 = arith.constant 0 : index
    %c0_57 = arith.constant 0 : index
    %113 = vector.load %arg8[%c0_56, %c0_57] : memref<128x256xbf16, #tpu.memory_space<vmem>>, vector<128x256xbf16>
    %c0_58 = arith.constant 0 : index
    %c0_59 = arith.constant 0 : index
    %114 = vector.load %arg5[%c0_58, %c0_59] : memref<256x128xbf16, #tpu.memory_space<vmem>>, vector<256x128xbf16>
    %cst_60 = arith.constant dense<0.000000e+00> : vector<128x128xf32>
    %115 = tpu.matmul %113, %114, %cst_60 {dimension_numbers = #tpu.dot_dimension_numbers<[1], [0], [0], [1], [0, 0, 1, 1], [], []>} : vector<128x256xbf16>, vector<256x128xbf16>, vector<128x128xf32> -> vector<128x128xf32>
    %c0_61 = arith.constant 0 : index
    %c0_62 = arith.constant 0 : index
    %116 = vector.load %arg6[%c0_61, %c0_62] : memref<1x128xf32, #tpu.memory_space<vmem>>, vector<1x128xf32>
    %117 = vector.broadcast %116 : vector<1x128xf32> to vector<128x128xf32>
    %118 = arith.addf %115, %117 : vector<128x128xf32>
    %c0_63 = arith.constant 0 : index
    %c0_64 = arith.constant 0 : index
    %119 = vector.load %arg7[%c0_63, %c0_64] : memref<128x128xf32, #tpu.memory_space<vmem>>, vector<128x128xf32>
    tpu.vector_store %arg7[%c0_63, %c0_64], %118 {strides = array<i32>} : memref<128x128xf32, #tpu.memory_space<vmem>>, vector<128x128xf32>,
    return
  }
}

</mosaic_0001>

<llo_original>
// kernel: tpu_custom_call.1
$region0: #{tpu_custom_call.1}
  #allocation0 [shape = 'u32[]', space=smem, size = 0x4, offset = 0x4, fixed_abs, tag = 'smem constant byte address 0x4 - core index']
  #allocation1 [shape = 'u32[144,128]{1,0:T(1,128)}', space=vmem, size = 0x12000, scoped, tag = 'internal scratch']
  #allocation2 [shape = 'bf16[128,256]{1,0:T(16,128)(2,1)}', space=vmem, size = 0x10000, scoped, tag = 'scratch operand']
  %s0 = inlined_call_operand.hbm [shape: bf16[128,128], index: 0, kind: input, shape index: {}]
  %s1 = inlined_call_operand.hbm [shape: f32[16,256], index: 1, kind: input, shape index: {}]
  %s2 = inlined_call_operand.hbm [shape: bf16[128,256], index: 2, kind: input, shape index: {}]
  %s3 = inlined_call_operand.vmem [shape: f32[1,256], index: 3, kind: input, shape index: {}]
  %s4 = inlined_call_operand.hbm [shape: bf16[256,256], index: 4, kind: input, shape index: {}]
  %s5 = inlined_call_operand.hbm [shape: bf16[256,128], index: 5, kind: input, shape index: {}]
  %s6 = inlined_call_operand.vmem [shape: f32[1,128], index: 6, kind: input, shape index: {}]
  %s7 = inlined_call_operand.hbm [shape: f32[128,128], index: 7, kind: output, shape index: {}]
  %s8 = sld [smem:[#allocation0]]
  $region58: #{tpu_custom_call.1} parent=0
    _
  %s10 = ssub.s32 1, %s8
  %s11 = scalar_select 0, %s10, %s8
  $region1: #{tpu_custom_call.1} parent=0
    #allocation3 [shape = 'u8[32768]{0}', space=vmem, size = 0x8000, scoped, tag = 'input window, operand 0, single buffered']
    #allocation4 [shape = 's32[1]{0}', space=sflag, size = 0x4, scoped, tag = 'scoped memory for tpu_custom_call.1']
    #allocation5 [shape = 's32[1]{0}', space=sflag, size = 0x4, scoped, tag = 'scoped memory for tpu_custom_call.1']
    #allocation6 [shape = 'u8[16384]{0}', space=vmem, size = 0x4000, scoped, tag = 'input window, operand 1, single buffered']
    #allocation7 [shape = 's32[1]{0}', space=sflag, size = 0x4, scoped, tag = 'scoped memory for tpu_custom_call.1']
    #allocation8 [shape = 'u8[65536]{0}', space=vmem, size = 0x10000, scoped, tag = 'input window, operand 2, single buffered']
    #allocation9 [shape = 'u8[131072]{0}', space=vmem, size = 0x20000, scoped, tag = 'input window, operand 4, single buffered']
    #allocation10 [shape = 's32[1]{0}', space=sflag, size = 0x4, scoped, tag = 'scoped memory for tpu_custom_call.1']
    #allocation11 [shape = 'u8[65536]{0}', space=vmem, size = 0x10000, scoped, tag = 'input window, operand 5, single buffered']
    #allocation12 [shape = 'u8[65536]{0}', space=vmem, size = 0x10000, scoped, tag = 'output window, operand 0, single buffered']
    %12 = vsyncpa [#allocation4], 0
    %13 = vsyncpa [#allocation7], 0
    %14 = vsyncpa [#allocation10], 0
    %15 = vsyncpa [#allocation5], 0
    // Predicated region
    $region2: #{tpu_custom_call.1} parent=1 // pred_check
      _
    $region3: #{tpu_custom_call.1} parent=1 // pred_check_branch
      %17 = sbr.rel (0) target = $region5
    $region4: #{tpu_custom_call.1} parent=1 // pred_region
      %s19 = ssub.s32 1024, 1024
      %20 = vsyncadd [#allocation4], %s19
      %s21 = sshll.u32 [#allocation3], 4
      %s22 = int_to_ptr.vmem [resolvable:$true] %s21
      %27 = dma.hbm_to_vmem [thread:$0]  %s0, 1024, %s22, [#allocation4], 64, 64, 4
    $region5: #{tpu_custom_call.1} parent=1 // pred_fallthru
      _
    // Predicated region
    $region6: #{tpu_custom_call.1} parent=1 // pred_check
      _
    $region7: #{tpu_custom_call.1} parent=1 // pred_check_branch
      %29 = sbr.rel (0) target = $region9
    $region8: #{tpu_custom_call.1} parent=1 // pred_region
      %s31 = ssub.s32 512, 512
      %32 = vsyncadd [#allocation7], %s31
      %s33 = sshll.u32 [#allocation6], 4
      %s34 = int_to_ptr.vmem [resolvable:$true] %s33
      %39 = dma.hbm_to_vmem [thread:$0]  %s1, 512, %s34, [#allocation7], 256, 256, 16
    $region9: #{tpu_custom_call.1} parent=1 // pred_fallthru
      _
    // Predicated region
    $region10: #{tpu_custom_call.1} parent=1 // pred_check
      _
    $region11: #{tpu_custom_call.1} parent=1 // pred_check_branch
      %41 = sbr.rel (0) target = $region13
    $region12: #{tpu_custom_call.1} parent=1 // pred_region
      %s43 = ssub.s32 2048, 2048
      %44 = vsyncadd [#allocation7], %s43
      %s45 = sshll.u32 [#allocation8], 4
      %s46 = int_to_ptr.vmem [resolvable:$true] %s45
      %51 = dma.hbm_to_vmem [thread:$0]  %s2, 2048, %s46, [#allocation7], 128, 128, 8
    $region13: #{tpu_custom_call.1} parent=1 // pred_fallthru
      _
    // Predicated region
    $region14: #{tpu_custom_call.1} parent=1 // pred_check
      _
    $region15: #{tpu_custom_call.1} parent=1 // pred_check_branch
      %53 = sbr.rel (0) target = $region17
    $region16: #{tpu_custom_call.1} parent=1 // pred_region
      _
    $region17: #{tpu_custom_call.1} parent=1 // pred_fallthru
      _
    // Predicated region
    $region18: #{tpu_custom_call.1} parent=1 // pred_check
      _
    $region19: #{tpu_custom_call.1} parent=1 // pred_check_branch
      %55 = sbr.rel (0) target = $region21
    $region20: #{tpu_custom_call.1} parent=1 // pred_region
      %s57 = ssub.s32 4096, 4096
      %58 = vsyncadd [#allocation10], %s57
      %s59 = sshll.u32 [#allocation9], 4
      %s60 = int_to_ptr.vmem [resolvable:$true] %s59
      %65 = dma.hbm_to_vmem [thread:$0]  %s4, 4096, %s60, [#allocation10], 128, 128, 8
    $region21: #{tpu_custom_call.1} parent=1 // pred_fallthru
      _
    // Predicated region
    $region22: #{tpu_custom_call.1} parent=1 // pred_check
      _
    $region23: #{tpu_custom_call.1} parent=1 // pred_check_branch
      %67 = sbr.rel (0) target = $region25
    $region24: #{tpu_custom_call.1} parent=1 // pred_region
      %s69 = ssub.s32 2048, 2048
      %70 = vsyncadd [#allocation10], %s69
      %s71 = sshll.u32 [#allocation11], 4
      %s72 = int_to_ptr.vmem [resolvable:$true] %s71
      %77 = dma.hbm_to_vmem [thread:$0]  %s5, 2048, %s72, [#allocation10], 64, 64, 4
    $region25: #{tpu_custom_call.1} parent=1 // pred_fallthru
      _
    // Predicated region
    $region26: #{tpu_custom_call.1} parent=1 // pred_check
      _
    $region27: #{tpu_custom_call.1} parent=1 // pred_check_branch
      %79 = sbr.rel (0) target = $region29
    $region28: #{tpu_custom_call.1} parent=1 // pred_region
      _
    $region29: #{tpu_custom_call.1} parent=1 // pred_fallthru
      _
    // Predicated region
    $region30: #{tpu_custom_call.1} parent=1 // pred_check
      _
    $region31: #{tpu_custom_call.1} parent=1 // pred_check_branch
      %81 = sbr.rel (0) target = $region33
    $region32: #{tpu_custom_call.1} parent=1 // pred_region
      %82 = dma.done [#allocation4], 1024
    $region33: #{tpu_custom_call.1} parent=1 // pred_fallthru
      _
    // Predicated region
    $region34: #{tpu_custom_call.1} parent=1 // pred_check
      _
    $region35: #{tpu_custom_call.1} parent=1 // pred_check_branch
      %84 = sbr.rel (0) target = $region37
    $region36: #{tpu_custom_call.1} parent=1 // pred_region
      %85 = dma.done [#allocation7], 512
    $region37: #{tpu_custom_call.1} parent=1 // pred_fallthru
      _
    // Predicated region
    $region38: #{tpu_custom_call.1} parent=1 // pred_check
      _
    $region39: #{tpu_custom_call.1} parent=1 // pred_check_branch
      %87 = sbr.rel (0) target = $region41
    $region40: #{tpu_custom_call.1} parent=1 // pred_region
      %88 = dma.done [#allocation7], 2048
    $region41: #{tpu_custom_call.1} parent=1 // pred_fallthru
      _
    // Predicated region
    $region42: #{tpu_custom_call.1} parent=1 // pred_check
      _
    $region43: #{tpu_custom_call.1} parent=1 // pred_check_branch
      %90 = sbr.rel (0) target = $region45
    $region44: #{tpu_custom_call.1} parent=1 // pred_region
      %91 = dma.done [#allocation10], 4096
    $region45: #{tpu_custom_call.1} parent=1 // pred_fallthru
      _
    // Predicated region
    $region46: #{tpu_custom_call.1} parent=1 // pred_check
      _
    $region47: #{tpu_custom_call.1} parent=1 // pred_check_branch
      %93 = sbr.rel (0) target = $region49
    $region48: #{tpu_custom_call.1} parent=1 // pred_region
      %94 = dma.done [#allocation10], 2048
    $region49: #{tpu_custom_call.1} parent=1 // pred_fallthru
      _
    %v96 = vld [vmem:[#allocation3] sm:$0xf]
    %v97 = vld [vmem:[#allocation3 + $0x4] sm:$0xf]
    %v98 = vld [vmem:[#allocation3 + $0x8] sm:$0xf]
    %v99 = vld [vmem:[#allocation3 + $0xc] sm:$0xf]
    %v100 = vld [vmem:[#allocation3 + $0x10] sm:$0xf]
    %v101 = vld [vmem:[#allocation3 + $0x14] sm:$0xf]
    %v102 = vld [vmem:[#allocation3 + $0x18] sm:$0xf]
    %v103 = vld [vmem:[#allocation3 + $0x1c] sm:$0xf]
    %v104 = vld [vmem:[#allocation3 + $0x20] sm:$0xf]
    %v105 = vld [vmem:[#allocation3 + $0x24] sm:$0xf]
    %v106 = vld [vmem:[#allocation3 + $0x28] sm:$0xf]
    %v107 = vld [vmem:[#allocation3 + $0x2c] sm:$0xf]
    %v108 = vld [vmem:[#allocation3 + $0x30] sm:$0xf]
    %v109 = vld [vmem:[#allocation3 + $0x34] sm:$0xf]
    %v110 = vld [vmem:[#allocation3 + $0x38] sm:$0xf]
    %v111 = vld [vmem:[#allocation3 + $0x3c] sm:$0xf]
    %v112 = vld [vmem:[#allocation8] sm:$0xff]
    %v113 = vld [vmem:[#allocation8 + $0x8] sm:$0xff]
    %v114 = vld [vmem:[#allocation8 + $0x10] sm:$0xff]
    %v115 = vld [vmem:[#allocation8 + $0x18] sm:$0xff]
    %v116 = vld [vmem:[#allocation8 + $0x20] sm:$0xff]
    %v117 = vld [vmem:[#allocation8 + $0x28] sm:$0xff]
    %v118 = vld [vmem:[#allocation8 + $0x30] sm:$0xff]
    %v119 = vld [vmem:[#allocation8 + $0x38] sm:$0xff]
    %v120 = vld [vmem:[#allocation8 + $0x40] sm:$0xff]
    %v121 = vld [vmem:[#allocation8 + $0x48] sm:$0xff]
    %v122 = vld [vmem:[#allocation8 + $0x50] sm:$0xff]
    %v123 = vld [vmem:[#allocation8 + $0x58] sm:$0xff]
    %v124 = vld [vmem:[#allocation8 + $0x60] sm:$0xff]
    %v125 = vld [vmem:[#allocation8 + $0x68] sm:$0xff]
    %v126 = vld [vmem:[#allocation8 + $0x70] sm:$0xff]
    %v127 = vld [vmem:[#allocation8 + $0x78] sm:$0xff]
    %v128 = vld [vmem:[%s3] sm:$0x3]
    %v130 = vlaneseq
    %v131 = vshrl.u32 %v130, 7
    %v132 = vsub.s32 0, %v131
    %v133 = vrot.slane %v128, %v132
    %v134 = vlaneseq
    %v135 = vshrl.u32 %v134, 7
    %v136 = vsub.s32 1, %v135
    %v137 = vrot.slane %v128, %v136
    %v156 = vunpack.c.l.b16 %v96
    %v157 = vunpack.c.l.b16 %v97
    %v158 = vunpack.c.l.b16 %v98
    %v159 = vunpack.c.l.b16 %v99
    %v160 = vunpack.c.l.b16 %v100
    %v161 = vunpack.c.l.b16 %v101
    %v162 = vunpack.c.l.b16 %v102
    %v163 = vunpack.c.l.b16 %v103
    %v164 = vunpack.c.l.b16 %v104
    %v165 = vunpack.c.l.b16 %v105
    %v166 = vunpack.c.l.b16 %v106
    %v167 = vunpack.c.l.b16 %v107
    %v168 = vunpack.c.l.b16 %v108
    %v169 = vunpack.c.l.b16 %v109
    %v170 = vunpack.c.l.b16 %v110
    %v171 = vunpack.c.l.b16 %v111
    %v172 = vpack.c.b16 %v157, %v156
    %v173 = vpack.c.b16 %v159, %v158
    %v174 = vpack.c.b16 %v161, %v160
    %v175 = vpack.c.b16 %v163, %v162
    %v176 = vpack.c.b16 %v165, %v164
    %v177 = vpack.c.b16 %v167, %v166
    %v178 = vpack.c.b16 %v169, %v168
    %v179 = vpack.c.b16 %v171, %v170
    %v204 = vunpack.c.l.b16 %v112
    %v205 = vunpack.c.h.b16 %v112
    %v206 = vunpack.c.l.b16 %v113
    %v207 = vunpack.c.h.b16 %v113
    %v208 = vunpack.c.l.b16 %v114
    %v209 = vunpack.c.h.b16 %v114
    %v210 = vunpack.c.l.b16 %v115
    %v211 = vunpack.c.h.b16 %v115
    %v212 = vunpack.c.l.b16 %v116
    %v213 = vunpack.c.h.b16 %v116
    %v214 = vunpack.c.l.b16 %v117
    %v215 = vunpack.c.h.b16 %v117
    %v216 = vunpack.c.l.b16 %v118
    %v217 = vunpack.c.h.b16 %v118
    %v218 = vunpack.c.l.b16 %v119
    %v219 = vunpack.c.h.b16 %v119
    %v220 = vunpack.c.l.b16 %v120
    %v221 = vunpack.c.h.b16 %v120
    %v222 = vunpack.c.l.b16 %v121
    %v223 = vunpack.c.h.b16 %v121
    %v224 = vunpack.c.l.b16 %v122
    %v225 = vunpack.c.h.b16 %v122
    %v226 = vunpack.c.l.b16 %v123
    %v227 = vunpack.c.h.b16 %v123
    %v228 = vunpack.c.l.b16 %v124
    %v229 = vunpack.c.h.b16 %v124
    %v230 = vunpack.c.l.b16 %v125
    %v231 = vunpack.c.h.b16 %v125
    %v232 = vunpack.c.l.b16 %v126
    %v233 = vunpack.c.h.b16 %v126
    %v234 = vunpack.c.l.b16 %v127
    %v235 = vunpack.c.h.b16 %v127
    %v236 = vpack.c.b16 %v206, %v204
    %v237 = vpack.c.b16 %v207, %v205
    %v238 = vpack.c.b16 %v210, %v208
    %v239 = vpack.c.b16 %v211, %v209
    %v240 = vpack.c.b16 %v214, %v212
    %v241 = vpack.c.b16 %v215, %v213
    %v242 = vpack.c.b16 %v218, %v216
    %v243 = vpack.c.b16 %v219, %v217
    %v244 = vpack.c.b16 %v222, %v220
    %v245 = vpack.c.b16 %v223, %v221
    %v246 = vpack.c.b16 %v226, %v224
    %v247 = vpack.c.b16 %v227, %v225
    %v248 = vpack.c.b16 %v230, %v228
    %v249 = vpack.c.b16 %v231, %v229
    %v250 = vpack.c.b16 %v234, %v232
    %v251 = vpack.c.b16 %v235, %v233
    %268 = vmatprep.subr.bf16.mxu0 %v237
    %269 = vmatpush1.bf16.msra.mxu0 %v236
    %270 = vmatprep.subr.bf16.mxu0 %v239
    %271 = vmatpush1.bf16.msra.mxu0 %v238
    %272 = vmatprep.subr.bf16.mxu0 %v241
    %273 = vmatpush1.bf16.msra.mxu0 %v240
    %274 = vmatprep.subr.bf16.mxu0 %v243
    %275 = vmatpush1.bf16.msra.mxu0 %v242
    %276 = vmatprep.subr.bf16.mxu0 %v245
    %277 = vmatpush1.bf16.msra.mxu0 %v244
    %278 = vmatprep.subr.bf16.mxu0 %v247
    %279 = vmatpush1.bf16.msra.mxu0 %v246
    %280 = vmatprep.subr.bf16.mxu0 %v249
    %281 = vmatpush1.bf16.msra.mxu0 %v248
    %282 = vmatprep.subr.bf16.mxu0 %v251
    %283 = vmatpush1.bf16.msra.mxu0 %v250
    %284 = vmatprep.subr.bf16.mxu0 0
    %285 = vmatpush1.bf16.msra.mxu0 0
    %286 = vmatprep.subr.bf16.mxu0 0
    %287 = vmatpush1.bf16.msra.mxu0 0
    %288 = vmatprep.subr.bf16.mxu0 0
    %289 = vmatpush1.bf16.msra.mxu0 0
    %290 = vmatprep.subr.bf16.mxu0 0
    %291 = vmatpush1.bf16.msra.mxu0 0
    %292 = vmatprep.subr.bf16.mxu0 0
    %293 = vmatpush1.bf16.msra.mxu0 0
    %294 = vmatprep.subr.bf16.mxu0 0
    %295 = vmatpush1.bf16.msra.mxu0 0
    %296 = vmatprep.subr.bf16.mxu0 0
    %297 = vmatpush1.bf16.msra.mxu0 0
    %298 = vmatprep.subr.bf16.mxu0 0
    %299 = vmatpush1.bf16.msra.mxu0 0
    %300 = vmatprep.mubr.bf16.mxu0 0
    %301 = vmatmul.mubr.bf16.gmra.mrb[0].mxu0 %v172
    %v302 = vpop.f32.mrb[0].mxu0
    %v303 = vadd.f32 %v133, %v302
    %v304 = vpop.f32.mrb[0].mxu0
    %v305 = vadd.f32 %v137, %v304
    %v306 = vpop.f32.mrb[0].mxu0
    %v307 = vadd.f32 %v133, %v306
    %v308 = vpop.f32.mrb[0].mxu0
    %v309 = vadd.f32 %v137, %v308
    %310 = vmatprep.mubr.bf16.mxu0 0
    %311 = vmatmul.mubr.bf16.gmra.mrb[0].mxu0 %v173
    %v312 = vpop.f32.mrb[0].mxu0
    %v313 = vadd.f32 %v133, %v312
    %v314 = vpop.f32.mrb[0].mxu0
    %v315 = vadd.f32 %v137, %v314
    %v316 = vpop.f32.mrb[0].mxu0
    %v317 = vadd.f32 %v133, %v316
    %v318 = vpop.f32.mrb[0].mxu0
    %v319 = vadd.f32 %v137, %v318
    %320 = vmatprep.mubr.bf16.mxu0 0
    %321 = vmatmul.mubr.bf16.gmra.mrb[0].mxu0 %v174
    %v322 = vpop.f32.mrb[0].mxu0
    %v323 = vadd.f32 %v133, %v322
    %v324 = vpop.f32.mrb[0].mxu0
    %v325 = vadd.f32 %v137, %v324
    %v326 = vpop.f32.mrb[0].mxu0
    %v327 = vadd.f32 %v133, %v326
    %v328 = vpop.f32.mrb[0].mxu0
    %v329 = vadd.f32 %v137, %v328
    %330 = vmatprep.mubr.bf16.mxu0 0
    %331 = vmatmul.mubr.bf16.gmra.mrb[0].mxu0 %v175
    %v332 = vpop.f32.mrb[0].mxu0
    %v333 = vadd.f32 %v133, %v332
    %v334 = vpop.f32.mrb[0].mxu0
    %v335 = vadd.f32 %v137, %v334
    %v336 = vpop.f32.mrb[0].mxu0
    %v337 = vadd.f32 %v133, %v336
    %v338 = vpop.f32.mrb[0].mxu0
    %v339 = vadd.f32 %v137, %v338
    %340 = vmatprep.mubr.bf16.mxu0 0
    %341 = vmatmul.mubr.bf16.gmra.mrb[0].mxu0 %v176
    %v342 = vpop.f32.mrb[0].mxu0
    %v343 = vadd.f32 %v133, %v342
    %v344 = vpop.f32.mrb[0].mxu0
    %v345 = vadd.f32 %v137, %v344
    %v346 = vpop.f32.mrb[0].mxu0
    %v347 = vadd.f32 %v133, %v346
    %v348 = vpop.f32.mrb[0].mxu0
    %v349 = vadd.f32 %v137, %v348
    %350 = vmatprep.mubr.bf16.mxu0 0
    %351 = vmatmul.mubr.bf16.gmra.mrb[0].mxu0 %v177
    %v352 = vpop.f32.mrb[0].mxu0
    %v353 = vadd.f32 %v133, %v352
    %v354 = vpop.f32.mrb[0].mxu0
    %v355 = vadd.f32 %v137, %v354
    %v356 = vpop.f32.mrb[0].mxu0
    %v357 = vadd.f32 %v133, %v356
    %v358 = vpop.f32.mrb[0].mxu0
    %v359 = vadd.f32 %v137, %v358
    %360 = vmatprep.mubr.bf16.mxu0 0
    %361 = vmatmul.mubr.bf16.gmra.mrb[0].mxu0 %v178
    %v362 = vpop.f32.mrb[0].mxu0
    %v363 = vadd.f32 %v133, %v362
    %v364 = vpop.f32.mrb[0].mxu0
    %v365 = vadd.f32 %v137, %v364
    %v366 = vpop.f32.mrb[0].mxu0
    %v367 = vadd.f32 %v133, %v366
    %v368 = vpop.f32.mrb[0].mxu0
    %v369 = vadd.f32 %v137, %v368
    %370 = vmatprep.mubr.bf16.mxu0 0
    %371 = vmatmul.mubr.bf16.gmra.mrb[0].mxu0 %v179
    %v372 = vpop.f32.mrb[0].mxu0
    %v373 = vadd.f32 %v133, %v372
    %v374 = vpop.f32.mrb[0].mxu0
    %v375 = vadd.f32 %v137, %v374
    %v376 = vpop.f32.mrb[0].mxu0
    %v377 = vadd.f32 %v133, %v376
    %v378 = vpop.f32.mrb[0].mxu0
    %v379 = vadd.f32 %v137, %v378
    %380 = vdwg.mxu0
    %v381 = vpack.c.bf16 %v307, %v303
    %v382 = vpack.c.bf16 %v309, %v305
    %v383 = vpack.c.bf16 %v317, %v313
    %v384 = vpack.c.bf16 %v319, %v315
    %v385 = vpack.c.bf16 %v327, %v323
    %v386 = vpack.c.bf16 %v329, %v325
    %v387 = vpack.c.bf16 %v337, %v333
    %v388 = vpack.c.bf16 %v339, %v335
    %v389 = vpack.c.bf16 %v347, %v343
    %v390 = vpack.c.bf16 %v349, %v345
    %v391 = vpack.c.bf16 %v357, %v353
    %v392 = vpack.c.bf16 %v359, %v355
    %v393 = vpack.c.bf16 %v367, %v363
    %v394 = vpack.c.bf16 %v369, %v365
    %v395 = vpack.c.bf16 %v377, %v373
    %v396 = vpack.c.bf16 %v379, %v375
    %397 = vst [vmem:[#allocation2] sm:$0xff] %v381
    %398 = vst [vmem:[#allocation2 + $0x8] sm:$0xff] %v382
    %399 = vst [vmem:[#allocation2 + $0x10] sm:$0xff] %v383
    %400 = vst [vmem:[#allocation2 + $0x18] sm:$0xff] %v384
    %401 = vst [vmem:[#allocation2 + $0x20] sm:$0xff] %v385
    %402 = vst [vmem:[#allocation2 + $0x28] sm:$0xff] %v386
    %403 = vst [vmem:[#allocation2 + $0x30] sm:$0xff] %v387
    %404 = vst [vmem:[#allocation2 + $0x38] sm:$0xff] %v388
    %405 = vst [vmem:[#allocation2 + $0x40] sm:$0xff] %v389
    %406 = vst [vmem:[#allocation2 + $0x48] sm:$0xff] %v390
    %407 = vst [vmem:[#allocation2 + $0x50] sm:$0xff] %v391
    %408 = vst [vmem:[#allocation2 + $0x58] sm:$0xff] %v392
    %409 = vst [vmem:[#allocation2 + $0x60] sm:$0xff] %v393
    %410 = vst [vmem:[#allocation2 + $0x68] sm:$0xff] %v394
    %411 = vst [vmem:[#allocation2 + $0x70] sm:$0xff] %v395
    %412 = vst [vmem:[#allocation2 + $0x78] sm:$0xff] %v396
    %v413 = vld [vmem:[#allocation6] sm:$0xff]
    %v414 = vld [vmem:[#allocation6 + $0x8] sm:$0xff]
    %v415 = vld [vmem:[#allocation6 + $0x10] sm:$0xff]
    %v416 = vld [vmem:[#allocation6 + $0x18] sm:$0xff]
    %s417 = smul.u32 0, 2
    %s418 = smul.addr %s417, 8
    %s419 = scalar_lea.vmem [#allocation2], %s418
    %v420 = vld [vmem:[%s419] sm:$0xff]
    %v421 = vld [vmem:[%s419 + $0x8] sm:$0xff]
    %v422 = vunpack.c.l.bf16 %v420
    %v423 = vunpack.c.l.bf16 %v421
    %v424 = vunpack.c.h.bf16 %v420
    %v425 = vunpack.c.h.bf16 %v421
    %v426 = vpack.c.bf16 %v415, %v413
    %v427 = vpack.c.bf16 %v416, %v414
    %v428 = vld [vmem:[#allocation9] sm:$0xff]
    %v429 = vld [vmem:[#allocation9 + $0x8] sm:$0xff]
    %v430 = vld [vmem:[#allocation9 + $0x10] sm:$0xff]
    %v431 = vld [vmem:[#allocation9 + $0x18] sm:$0xff]
    %v432 = vld [vmem:[#allocation9 + $0x20] sm:$0xff]
    %v433 = vld [vmem:[#allocation9 + $0x28] sm:$0xff]
    %v434 = vld [vmem:[#allocation9 + $0x30] sm:$0xff]
    %v435 = vld [vmem:[#allocation9 + $0x38] sm:$0xff]
    %v436 = vld [vmem:[#allocation9 + $0x40] sm:$0xff]
    %v437 = vld [vmem:[#allocation9 + $0x48] sm:$0xff]
    %v438 = vld [vmem:[#allocation9 + $0x50] sm:$0xff]
    %v439 = vld [vmem:[#allocation9 + $0x58] sm:$0xff]
    %v440 = vld [vmem:[#allocation9 + $0x60] sm:$0xff]
    %v441 = vld [vmem:[#allocation9 + $0x68] sm:$0xff]
    %v442 = vld [vmem:[#allocation9 + $0x70] sm:$0xff]
    %v443 = vld [vmem:[#allocation9 + $0x78] sm:$0xff]
    %v444 = vld [vmem:[#allocation9 + $0x80] sm:$0xff]
    %v445 = vld [vmem:[#allocation9 + $0x88] sm:$0xff]
    %v446 = vld [vmem:[#allocation9 + $0x90] sm:$0xff]
    %v447 = vld [vmem:[#allocation9 + $0x98] sm:$0xff]
    %v448 = vld [vmem:[#allocation9 + $0xa0] sm:$0xff]
    %v449 = vld [vmem:[#allocation9 + $0xa8] sm:$0xff]
    %v450 = vld [vmem:[#allocation9 + $0xb0] sm:$0xff]
    %v451 = vld [vmem:[#allocation9 + $0xb8] sm:$0xff]
    %v452 = vld [vmem:[#allocation9 + $0xc0] sm:$0xff]
    %v453 = vld [vmem:[#allocation9 + $0xc8] sm:$0xff]
    %v454 = vld [vmem:[#allocation9 + $0xd0] sm:$0xff]
    %v455 = vld [vmem:[#allocation9 + $0xd8] sm:$0xff]
    %v456 = vld [vmem:[#allocation9 + $0xe0] sm:$0xff]
    %v457 = vld [vmem:[#allocation9 + $0xe8] sm:$0xff]
    %v458 = vld [vmem:[#allocation9 + $0xf0] sm:$0xff]
    %v459 = vld [vmem:[#allocation9 + $0xf8] sm:$0xff]
    %v492 = vunpack.c.l.b16 %v428
    %v493 = vunpack.c.h.b16 %v428
    %v494 = vunpack.c.l.b16 %v429
    %v495 = vunpack.c.h.b16 %v429
    %v496 = vunpack.c.l.b16 %v430
    %v497 = vunpack.c.h.b16 %v430
    %v498 = vunpack.c.l.b16 %v431
    %v499 = vunpack.c.h.b16 %v431
    %v500 = vunpack.c.l.b16 %v432
    %v501 = vunpack.c.h.b16 %v432
    %v502 = vunpack.c.l.b16 %v433
    %v503 = vunpack.c.h.b16 %v433
    %v504 = vunpack.c.l.b16 %v434
    %v505 = vunpack.c.h.b16 %v434
    %v506 = vunpack.c.l.b16 %v435
    %v507 = vunpack.c.h.b16 %v435
    %v508 = vunpack.c.l.b16 %v436
    %v509 = vunpack.c.h.b16 %v436
    %v510 = vunpack.c.l.b16 %v437
    %v511 = vunpack.c.h.b16 %v437
    %v512 = vunpack.c.l.b16 %v438
    %v513 = vunpack.c.h.b16 %v438
    %v514 = vunpack.c.l.b16 %v439
    %v515 = vunpack.c.h.b16 %v439
    %v516 = vunpack.c.l.b16 %v440
    %v517 = vunpack.c.h.b16 %v440
    %v518 = vunpack.c.l.b16 %v441
    %v519 = vunpack.c.h.b16 %v441
    %v520 = vunpack.c.l.b16 %v442
    %v521 = vunpack.c.h.b16 %v442
    %v522 = vunpack.c.l.b16 %v443
    %v523 = vunpack.c.h.b16 %v443
    %v524 = vunpack.c.l.b16 %v444
    %v525 = vunpack.c.h.b16 %v444
    %v526 = vunpack.c.l.b16 %v445
    %v527 = vunpack.c.h.b16 %v445
    %v528 = vunpack.c.l.b16 %v446
    %v529 = vunpack.c.h.b16 %v446
    %v530 = vunpack.c.l.b16 %v447
    %v531 = vunpack.c.h.b16 %v447
    %v532 = vunpack.c.l.b16 %v448
    %v533 = vunpack.c.h.b16 %v448
    %v534 = vunpack.c.l.b16 %v449
    %v535 = vunpack.c.h.b16 %v449
    %v536 = vunpack.c.l.b16 %v450
    %v537 = vunpack.c.h.b16 %v450
    %v538 = vunpack.c.l.b16 %v451
    %v539 = vunpack.c.h.b16 %v451
    %v540 = vunpack.c.l.b16 %v452
    %v541 = vunpack.c.h.b16 %v452
    %v542 = vunpack.c.l.b16 %v453
    %v543 = vunpack.c.h.b16 %v453
    %v544 = vunpack.c.l.b16 %v454
    %v545 = vunpack.c.h.b16 %v454
    %v546 = vunpack.c.l.b16 %v455
    %v547 = vunpack.c.h.b16 %v455
    %v548 = vunpack.c.l.b16 %v456
    %v549 = vunpack.c.h.b16 %v456
    %v550 = vunpack.c.l.b16 %v457
    %v551 = vunpack.c.h.b16 %v457
    %v552 = vunpack.c.l.b16 %v458
    %v553 = vunpack.c.h.b16 %v458
    %v554 = vunpack.c.l.b16 %v459
    %v555 = vunpack.c.h.b16 %v459
    %v556 = vpack.c.b16 %v494, %v492
    %v557 = vpack.c.b16 %v495, %v493
    %v558 = vpack.c.b16 %v498, %v496
    %v559 = vpack.c.b16 %v499, %v497
    %v560 = vpack.c.b16 %v502, %v500
    %v561 = vpack.c.b16 %v503, %v501
    %v562 = vpack.c.b16 %v506, %v504
    %v563 = vpack.c.b16 %v507, %v505
    %v564 = vpack.c.b16 %v510, %v508
    %v565 = vpack.c.b16 %v511, %v509
    %v566 = vpack.c.b16 %v514, %v512
    %v567 = vpack.c.b16 %v515, %v513
    %v568 = vpack.c.b16 %v518, %v516
    %v569 = vpack.c.b16 %v519, %v517
    %v570 = vpack.c.b16 %v522, %v520
    %v571 = vpack.c.b16 %v523, %v521
    %v572 = vpack.c.b16 %v526, %v524
    %v573 = vpack.c.b16 %v527, %v525
    %v574 = vpack.c.b16 %v530, %v528
    %v575 = vpack.c.b16 %v531, %v529
    %v576 = vpack.c.b16 %v534, %v532
    %v577 = vpack.c.b16 %v535, %v533
    %v578 = vpack.c.b16 %v538, %v536
    %v579 = vpack.c.b16 %v539, %v537
    %v580 = vpack.c.b16 %v542, %v540
    %v581 = vpack.c.b16 %v543, %v541
    %v582 = vpack.c.b16 %v546, %v544
    %v583 = vpack.c.b16 %v547, %v545
    %v584 = vpack.c.b16 %v550, %v548
    %v585 = vpack.c.b16 %v551, %v549
    %v586 = vpack.c.b16 %v554, %v552
    %v587 = vpack.c.b16 %v555, %v553
    %620 = vmatprep.subr.bf16.mxu0 %v557
    %621 = vmatpush1.bf16.msra.mxu0 %v556
    %622 = vmatprep.subr.bf16.mxu0 %v559
    %623 = vmatpush1.bf16.msra.mxu0 %v558
    %624 = vmatprep.subr.bf16.mxu0 %v561
    %625 = vmatpush1.bf16.msra.mxu0 %v560
    %626 = vmatprep.subr.bf16.mxu0 %v563
    %627 = vmatpush1.bf16.msra.mxu0 %v562
    %628 = vmatprep.subr.bf16.mxu0 %v565
    %629 = vmatpush1.bf16.msra.mxu0 %v564
    %630 = vmatprep.subr.bf16.mxu0 %v567
    %631 = vmatpush1.bf16.msra.mxu0 %v566
    %632 = vmatprep.subr.bf16.mxu0 %v569
    %633 = vmatpush1.bf16.msra.mxu0 %v568
    %634 = vmatprep.subr.bf16.mxu0 %v571
    %635 = vmatpush1.bf16.msra.mxu0 %v570
    %636 = vmatprep.subr.bf16.mxu0 %v573
    %637 = vmatpush1.bf16.msra.mxu0 %v572
    %638 = vmatprep.subr.bf16.mxu0 %v575
    %639 = vmatpush1.bf16.msra.mxu0 %v574
    %640 = vmatprep.subr.bf16.mxu0 %v577
    %641 = vmatpush1.bf16.msra.mxu0 %v576
    %642 = vmatprep.subr.bf16.mxu0 %v579
    %643 = vmatpush1.bf16.msra.mxu0 %v578
    %644 = vmatprep.subr.bf16.mxu0 %v581
    %645 = vmatpush1.bf16.msra.mxu0 %v580
    %646 = vmatprep.subr.bf16.mxu0 %v583
    %647 = vmatpush1.bf16.msra.mxu0 %v582
    %648 = vmatprep.subr.bf16.mxu0 %v585
    %649 = vmatpush1.bf16.msra.mxu0 %v584
    %650 = vmatprep.subr.bf16.mxu0 %v587
    %651 = vmatpush1.bf16.msra.mxu0 %v586
    %652 = vmatprep.mubr.bf16.mxu0 %v427
    %653 = vmatmul.mubr.bf16.gmra.mrb[0].mxu0 %v426
    %v654 = vpop.f32.mrb[0].mxu0
    %v655 = vadd.f32 0.0, %v654
    %v656 = vpop.f32.mrb[0].mxu0
    %v657 = vadd.f32 0.0, %v656
    %v658 = vpop.f32.mrb[0].mxu0
    %v659 = vadd.f32 0.0, %v658
    %v660 = vpop.f32.mrb[0].mxu0
    %v661 = vadd.f32 0.0, %v660
    %662 = vdwg.mxu0
    %v663 = vadd.f32 %v422, %v655
    %v664 = vadd.f32 %v423, %v657
    %v665 = vadd.f32 %v424, %v659
    %v666 = vadd.f32 %v425, %v661
    %v667 = vtanh.pop %v663
    %v668 = vtanh.pop %v664
    %v669 = vtanh.pop %v665
    %v670 = vtanh.pop %v666
    %v671 = vpack.c.bf16 %v669, %v667
    %v672 = vpack.c.bf16 %v670, %v668
    %673 = vst [vmem:[%s419] sm:$0xff] %v671
    %674 = vst [vmem:[%s419 + $0x8] sm:$0xff] %v672
    %s675 = smul.u32 1, 2
    %s676 = smul.addr %s675, 8
    %s677 = scalar_lea.vmem [#allocation2], %s676
    %v678 = vld [vmem:[%s677] sm:$0xff]
    %v679 = vld [vmem:[%s677 + $0x8] sm:$0xff]
    %v680 = vunpack.c.l.bf16 %v678
    %v681 = vunpack.c.l.bf16 %v679
    %v682 = vunpack.c.h.bf16 %v678
    %v683 = vunpack.c.h.bf16 %v679
    %v684 = vld [vmem:[#allocation9] sm:$0xff]
    %v685 = vld [vmem:[#allocation9 + $0x8] sm:$0xff]
    %v686 = vld [vmem:[#allocation9 + $0x10] sm:$0xff]
    %v687 = vld [vmem:[#allocation9 + $0x18] sm:$0xff]
    %v688 = vld [vmem:[#allocation9 + $0x20] sm:$0xff]
    %v689 = vld [vmem:[#allocation9 + $0x28] sm:$0xff]
    %v690 = vld [vmem:[#allocation9 + $0x30] sm:$0xff]
    %v691 = vld [vmem:[#allocation9 + $0x38] sm:$0xff]
    %v692 = vld [vmem:[#allocation9 + $0x40] sm:$0xff]
    %v693 = vld [vmem:[#allocation9 + $0x48] sm:$0xff]
    %v694 = vld [vmem:[#allocation9 + $0x50] sm:$0xff]
    %v695 = vld [vmem:[#allocation9 + $0x58] sm:$0xff]
    %v696 = vld [vmem:[#allocation9 + $0x60] sm:$0xff]
    %v697 = vld [vmem:[#allocation9 + $0x68] sm:$0xff]
    %v698 = vld [vmem:[#allocation9 + $0x70] sm:$0xff]
    %v699 = vld [vmem:[#allocation9 + $0x78] sm:$0xff]
    %v700 = vld [vmem:[#allocation9 + $0x80] sm:$0xff]
    %v701 = vld [vmem:[#allocation9 + $0x88] sm:$0xff]
    %v702 = vld [vmem:[#allocation9 + $0x90] sm:$0xff]
    %v703 = vld [vmem:[#allocation9 + $0x98] sm:$0xff]
    %v704 = vld [vmem:[#allocation9 + $0xa0] sm:$0xff]
    %v705 = vld [vmem:[#allocation9 + $0xa8] sm:$0xff]
    %v706 = vld [vmem:[#allocation9 + $0xb0] sm:$0xff]
    %v707 = vld [vmem:[#allocation9 + $0xb8] sm:$0xff]
    %v708 = vld [vmem:[#allocation9 + $0xc0] sm:$0xff]
    %v709 = vld [vmem:[#allocation9 + $0xc8] sm:$0xff]
    %v710 = vld [vmem:[#allocation9 + $0xd0] sm:$0xff]
    %v711 = vld [vmem:[#allocation9 + $0xd8] sm:$0xff]
    %v712 = vld [vmem:[#allocation9 + $0xe0] sm:$0xff]
    %v713 = vld [vmem:[#allocation9 + $0xe8] sm:$0xff]
    %v714 = vld [vmem:[#allocation9 + $0xf0] sm:$0xff]
    %v715 = vld [vmem:[#allocation9 + $0xf8] sm:$0xff]
    %v748 = vunpack.c.l.b16 %v684
    %v749 = vunpack.c.h.b16 %v684
    %v750 = vunpack.c.l.b16 %v685
    %v751 = vunpack.c.h.b16 %v685
    %v752 = vunpack.c.l.b16 %v686
    %v753 = vunpack.c.h.b16 %v686
    %v754 = vunpack.c.l.b16 %v687
    %v755 = vunpack.c.h.b16 %v687
    %v756 = vunpack.c.l.b16 %v688
    %v757 = vunpack.c.h.b16 %v688
    %v758 = vunpack.c.l.b16 %v689
    %v759 = vunpack.c.h.b16 %v689
    %v760 = vunpack.c.l.b16 %v690
    %v761 = vunpack.c.h.b16 %v690
    %v762 = vunpack.c.l.b16 %v691
    %v763 = vunpack.c.h.b16 %v691
    %v764 = vunpack.c.l.b16 %v692
    %v765 = vunpack.c.h.b16 %v692
    %v766 = vunpack.c.l.b16 %v693
    %v767 = vunpack.c.h.b16 %v693
    %v768 = vunpack.c.l.b16 %v694
    %v769 = vunpack.c.h.b16 %v694
    %v770 = vunpack.c.l.b16 %v695
    %v771 = vunpack.c.h.b16 %v695
    %v772 = vunpack.c.l.b16 %v696
    %v773 = vunpack.c.h.b16 %v696
    %v774 = vunpack.c.l.b16 %v697
    %v775 = vunpack.c.h.b16 %v697
    %v776 = vunpack.c.l.b16 %v698
    %v777 = vunpack.c.h.b16 %v698
    %v778 = vunpack.c.l.b16 %v699
    %v779 = vunpack.c.h.b16 %v699
    %v780 = vunpack.c.l.b16 %v700
    %v781 = vunpack.c.h.b16 %v700
    %v782 = vunpack.c.l.b16 %v701
    %v783 = vunpack.c.h.b16 %v701
    %v784 = vunpack.c.l.b16 %v702
    %v785 = vunpack.c.h.b16 %v702
    %v786 = vunpack.c.l.b16 %v703
    %v787 = vunpack.c.h.b16 %v703
    %v788 = vunpack.c.l.b16 %v704
    %v789 = vunpack.c.h.b16 %v704
    %v790 = vunpack.c.l.b16 %v705
    %v791 = vunpack.c.h.b16 %v705
    %v792 = vunpack.c.l.b16 %v706
    %v793 = vunpack.c.h.b16 %v706
    %v794 = vunpack.c.l.b16 %v707
    %v795 = vunpack.c.h.b16 %v707
    %v796 = vunpack.c.l.b16 %v708
    %v797 = vunpack.c.h.b16 %v708
    %v798 = vunpack.c.l.b16 %v709
    %v799 = vunpack.c.h.b16 %v709
    %v800 = vunpack.c.l.b16 %v710
    %v801 = vunpack.c.h.b16 %v710
    %v802 = vunpack.c.l.b16 %v711
    %v803 = vunpack.c.h.b16 %v711
    %v804 = vunpack.c.l.b16 %v712
    %v805 = vunpack.c.h.b16 %v712
    %v806 = vunpack.c.l.b16 %v713
    %v807 = vunpack.c.h.b16 %v713
    %v808 = vunpack.c.l.b16 %v714
    %v809 = vunpack.c.h.b16 %v714
    %v810 = vunpack.c.l.b16 %v715
    %v811 = vunpack.c.h.b16 %v715
    %v812 = vpack.c.b16 %v750, %v748
    %v813 = vpack.c.b16 %v751, %v749
    %v814 = vpack.c.b16 %v754, %v752
    %v815 = vpack.c.b16 %v755, %v753
    %v816 = vpack.c.b16 %v758, %v756
    %v817 = vpack.c.b16 %v759, %v757
    %v818 = vpack.c.b16 %v762, %v760
    %v819 = vpack.c.b16 %v763, %v761
    %v820 = vpack.c.b16 %v766, %v764
    %v821 = vpack.c.b16 %v767, %v765
    %v822 = vpack.c.b16 %v770, %v768
    %v823 = vpack.c.b16 %v771, %v769
    %v824 = vpack.c.b16 %v774, %v772
    %v825 = vpack.c.b16 %v775, %v773
    %v826 = vpack.c.b16 %v778, %v776
    %v827 = vpack.c.b16 %v779, %v777
    %v828 = vpack.c.b16 %v782, %v780
    %v829 = vpack.c.b16 %v783, %v781
    %v830 = vpack.c.b16 %v786, %v784
    %v831 = vpack.c.b16 %v787, %v785
    %v832 = vpack.c.b16 %v790, %v788
    %v833 = vpack.c.b16 %v791, %v789
    %v834 = vpack.c.b16 %v794, %v792
    %v835 = vpack.c.b16 %v795, %v793
    %v836 = vpack.c.b16 %v798, %v796
    %v837 = vpack.c.b16 %v799, %v797
    %v838 = vpack.c.b16 %v802, %v800
    %v839 = vpack.c.b16 %v803, %v801
    %v840 = vpack.c.b16 %v806, %v804
    %v841 = vpack.c.b16 %v807, %v805
    %v842 = vpack.c.b16 %v810, %v808
    %v843 = vpack.c.b16 %v811, %v809
    %876 = vmatprep.subr.bf16.mxu0 %v813
    %877 = vmatpush1.bf16.msra.mxu0 %v812
    %878 = vmatprep.subr.bf16.mxu0 %v815
    %879 = vmatpush1.bf16.msra.mxu0 %v814
    %880 = vmatprep.subr.bf16.mxu0 %v817
    %881 = vmatpush1.bf16.msra.mxu0 %v816
    %882 = vmatprep.subr.bf16.mxu0 %v819
    %883 = vmatpush1.bf16.msra.mxu0 %v818
    %884 = vmatprep.subr.bf16.mxu0 %v821
    %885 = vmatpush1.bf16.msra.mxu0 %v820
    %886 = vmatprep.subr.bf16.mxu0 %v823
    %887 = vmatpush1.bf16.msra.mxu0 %v822
    %888 = vmatprep.subr.bf16.mxu0 %v825
    %889 = vmatpush1.bf16.msra.mxu0 %v824
    %890 = vmatprep.subr.bf16.mxu0 %v827
    %891 = vmatpush1.bf16.msra.mxu0 %v826
    %892 = vmatprep.subr.bf16.mxu0 %v829
    %893 = vmatpush1.bf16.msra.mxu0 %v828
    %894 = vmatprep.subr.bf16.mxu0 %v831
    %895 = vmatpush1.bf16.msra.mxu0 %v830
    %896 = vmatprep.subr.bf16.mxu0 %v833
    %897 = vmatpush1.bf16.msra.mxu0 %v832
    %898 = vmatprep.subr.bf16.mxu0 %v835
    %899 = vmatpush1.bf16.msra.mxu0 %v834
    %900 = vmatprep.subr.bf16.mxu0 %v837
    %901 = vmatpush1.bf16.msra.mxu0 %v836
    %902 = vmatprep.subr.bf16.mxu0 %v839
    %903 = vmatpush1.bf16.msra.mxu0 %v838
    %904 = vmatprep.subr.bf16.mxu0 %v841
    %905 = vmatpush1.bf16.msra.mxu0 %v840
    %906 = vmatprep.subr.bf16.mxu0 %v843
    %907 = vmatpush1.bf16.msra.mxu0 %v842
    %908 = vmatprep.mubr.bf16.mxu0 %v672
    %909 = vmatmul.mubr.bf16.gmra.mrb[0].mxu0 %v671
    %v910 = vpop.f32.mrb[0].mxu0
    %v911 = vadd.f32 0.0, %v910
    %v912 = vpop.f32.mrb[0].mxu0
    %v913 = vadd.f32 0.0, %v912
    %v914 = vpop.f32.mrb[0].mxu0
    %v915 = vadd.f32 0.0, %v914
    %v916 = vpop.f32.mrb[0].mxu0
    %v917 = vadd.f32 0.0, %v916
    %918 = vdwg.mxu0
    %v919 = vadd.f32 %v680, %v911
    %v920 = vadd.f32 %v681, %v913
    %v921 = vadd.f32 %v682, %v915
    %v922 = vadd.f32 %v683, %v917
    %v923 = vtanh.pop %v919
    %v924 = vtanh.pop %v920
    %v925 = vtanh.pop %v921
    %v926 = vtanh.pop %v922
    %v927 = vpack.c.bf16 %v925, %v923
    %v928 = vpack.c.bf16 %v926, %v924
    %929 = vst [vmem:[%s677] sm:$0xff] %v927
    %930 = vst [vmem:[%s677 + $0x8] sm:$0xff] %v928
    %s931 = smul.u32 2, 2
    %s932 = smul.addr %s931, 8
    %s933 = scalar_lea.vmem [#allocation2], %s932
    %v934 = vld [vmem:[%s933] sm:$0xff]
    %v935 = vld [vmem:[%s933 + $0x8] sm:$0xff]
    %v936 = vunpack.c.l.bf16 %v934
    %v937 = vunpack.c.l.bf16 %v935
    %v938 = vunpack.c.h.bf16 %v934
    %v939 = vunpack.c.h.bf16 %v935
    %v940 = vld [vmem:[#allocation9] sm:$0xff]
    %v941 = vld [vmem:[#allocation9 + $0x8] sm:$0xff]
    %v942 = vld [vmem:[#allocation9 + $0x10] sm:$0xff]
    %v943 = vld [vmem:[#allocation9 + $0x18] sm:$0xff]
    %v944 = vld [vmem:[#allocation9 + $0x20] sm:$0xff]
    %v945 = vld [vmem:[#allocation9 + $0x28] sm:$0xff]
    %v946 = vld [vmem:[#allocation9 + $0x30] sm:$0xff]
    %v947 = vld [vmem:[#allocation9 + $0x38] sm:$0xff]
    %v948 = vld [vmem:[#allocation9 + $0x40] sm:$0xff]
    %v949 = vld [vmem:[#allocation9 + $0x48] sm:$0xff]
    %v950 = vld [vmem:[#allocation9 + $0x50] sm:$0xff]
    %v951 = vld [vmem:[#allocation9 + $0x58] sm:$0xff]
    %v952 = vld [vmem:[#allocation9 + $0x60] sm:$0xff]
    %v953 = vld [vmem:[#allocation9 + $0x68] sm:$0xff]
    %v954 = vld [vmem:[#allocation9 + $0x70] sm:$0xff]
    %v955 = vld [vmem:[#allocation9 + $0x78] sm:$0xff]
    %v956 = vld [vmem:[#allocation9 + $0x80] sm:$0xff]
    %v957 = vld [vmem:[#allocation9 + $0x88] sm:$0xff]
    %v958 = vld [vmem:[#allocation9 + $0x90] sm:$0xff]
    %v959 = vld [vmem:[#allocation9 + $0x98] sm:$0xff]
    %v960 = vld [vmem:[#allocation9 + $0xa0] sm:$0xff]
    %v961 = vld [vmem:[#allocation9 + $0xa8] sm:$0xff]
    %v962 = vld [vmem:[#allocation9 + $0xb0] sm:$0xff]
    %v963 = vld [vmem:[#allocation9 + $0xb8] sm:$0xff]
    %v964 = vld [vmem:[#allocation9 + $0xc0] sm:$0xff]
    %v965 = vld [vmem:[#allocation9 + $0xc8] sm:$0xff]
    %v966 = vld [vmem:[#allocation9 + $0xd0] sm:$0xff]
    %v967 = vld [vmem:[#allocation9 + $0xd8] sm:$0xff]
    %v968 = vld [vmem:[#allocation9 + $0xe0] sm:$0xff]
    %v969 = vld [vmem:[#allocation9 + $0xe8] sm:$0xff]
    %v970 = vld [vmem:[#allocation9 + $0xf0] sm:$0xff]
    %v971 = vld [vmem:[#allocation9 + $0xf8] sm:$0xff]
    %v1004 = vunpack.c.l.b16 %v940
    %v1005 = vunpack.c.h.b16 %v940
    %v1006 = vunpack.c.l.b16 %v941
    %v1007 = vunpack.c.h.b16 %v941
    %v1008 = vunpack.c.l.b16 %v942
    %v1009 = vunpack.c.h.b16 %v942
    %v1010 = vunpack.c.l.b16 %v943
    %v1011 = vunpack.c.h.b16 %v943
    %v1012 = vunpack.c.l.b16 %v944
    %v1013 = vunpack.c.h.b16 %v944
    %v1014 = vunpack.c.l.b16 %v945
    %v1015 = vunpack.c.h.b16 %v945
    %v1016 = vunpack.c.l.b16 %v946
    %v1017 = vunpack.c.h.b16 %v946
    %v1018 = vunpack.c.l.b16 %v947
    %v1019 = vunpack.c.h.b16 %v947
    %v1020 = vunpack.c.l.b16 %v948
    %v1021 = vunpack.c.h.b16 %v948
    %v1022 = vunpack.c.l.b16 %v949
    %v1023 = vunpack.c.h.b16 %v949
    %v1024 = vunpack.c.l.b16 %v950
    %v1025 = vunpack.c.h.b16 %v950
    %v1026 = vunpack.c.l.b16 %v951
    %v1027 = vunpack.c.h.b16 %v951
    %v1028 = vunpack.c.l.b16 %v952
    %v1029 = vunpack.c.h.b16 %v952
    %v1030 = vunpack.c.l.b16 %v953
    %v1031 = vunpack.c.h.b16 %v953
    %v1032 = vunpack.c.l.b16 %v954
    %v1033 = vunpack.c.h.b16 %v954
    %v1034 = vunpack.c.l.b16 %v955
    %v1035 = vunpack.c.h.b16 %v955
    %v1036 = vunpack.c.l.b16 %v956
    %v1037 = vunpack.c.h.b16 %v956
    %v1038 = vunpack.c.l.b16 %v957
    %v1039 = vunpack.c.h.b16 %v957
    %v1040 = vunpack.c.l.b16 %v958
    %v1041 = vunpack.c.h.b16 %v958
    %v1042 = vunpack.c.l.b16 %v959
    %v1043 = vunpack.c.h.b16 %v959
    %v1044 = vunpack.c.l.b16 %v960
    %v1045 = vunpack.c.h.b16 %v960
    %v1046 = vunpack.c.l.b16 %v961
    %v1047 = vunpack.c.h.b16 %v961
    %v1048 = vunpack.c.l.b16 %v962
    %v1049 = vunpack.c.h.b16 %v962
    %v1050 = vunpack.c.l.b16 %v963
    %v1051 = vunpack.c.h.b16 %v963
    %v1052 = vunpack.c.l.b16 %v964
    %v1053 = vunpack.c.h.b16 %v964
    %v1054 = vunpack.c.l.b16 %v965
    %v1055 = vunpack.c.h.b16 %v965
    %v1056 = vunpack.c.l.b16 %v966
    %v1057 = vunpack.c.h.b16 %v966
    %v1058 = vunpack.c.l.b16 %v967
    %v1059 = vunpack.c.h.b16 %v967
    %v1060 = vunpack.c.l.b16 %v968
    %v1061 = vunpack.c.h.b16 %v968
    %v1062 = vunpack.c.l.b16 %v969
    %v1063 = vunpack.c.h.b16 %v969
    %v1064 = vunpack.c.l.b16 %v970
    %v1065 = vunpack.c.h.b16 %v970
    %v1066 = vunpack.c.l.b16 %v971
    %v1067 = vunpack.c.h.b16 %v971
    %v1068 = vpack.c.b16 %v1006, %v1004
    %v1069 = vpack.c.b16 %v1007, %v1005
    %v1070 = vpack.c.b16 %v1010, %v1008
    %v1071 = vpack.c.b16 %v1011, %v1009
    %v1072 = vpack.c.b16 %v1014, %v1012
    %v1073 = vpack.c.b16 %v1015, %v1013
    %v1074 = vpack.c.b16 %v1018, %v1016
    %v1075 = vpack.c.b16 %v1019, %v1017
    %v1076 = vpack.c.b16 %v1022, %v1020
    %v1077 = vpack.c.b16 %v1023, %v1021
    %v1078 = vpack.c.b16 %v1026, %v1024
    %v1079 = vpack.c.b16 %v1027, %v1025
    %v1080 = vpack.c.b16 %v1030, %v1028
    %v1081 = vpack.c.b16 %v1031, %v1029
    %v1082 = vpack.c.b16 %v1034, %v1032
    %v1083 = vpack.c.b16 %v1035, %v1033
    %v1084 = vpack.c.b16 %v1038, %v1036
    %v1085 = vpack.c.b16 %v1039, %v1037
    %v1086 = vpack.c.b16 %v1042, %v1040
    %v1087 = vpack.c.b16 %v1043, %v1041
    %v1088 = vpack.c.b16 %v1046, %v1044
    %v1089 = vpack.c.b16 %v1047, %v1045
    %v1090 = vpack.c.b16 %v1050, %v1048
    %v1091 = vpack.c.b16 %v1051, %v1049
    %v1092 = vpack.c.b16 %v1054, %v1052
    %v1093 = vpack.c.b16 %v1055, %v1053
    %v1094 = vpack.c.b16 %v1058, %v1056
    %v1095 = vpack.c.b16 %v1059, %v1057
    %v1096 = vpack.c.b16 %v1062, %v1060
    %v1097 = vpack.c.b16 %v1063, %v1061
    %v1098 = vpack.c.b16 %v1066, %v1064
    %v1099 = vpack.c.b16 %v1067, %v1065
    %1132 = vmatprep.subr.bf16.mxu0 %v1069
    %1133 = vmatpush1.bf16.msra.mxu0 %v1068
    %1134 = vmatprep.subr.bf16.mxu0 %v1071
    %1135 = vmatpush1.bf16.msra.mxu0 %v1070
    %1136 = vmatprep.subr.bf16.mxu0 %v1073
    %1137 = vmatpush1.bf16.msra.mxu0 %v1072
    %1138 = vmatprep.subr.bf16.mxu0 %v1075
    %1139 = vmatpush1.bf16.msra.mxu0 %v1074
    %1140 = vmatprep.subr.bf16.mxu0 %v1077
    %1141 = vmatpush1.bf16.msra.mxu0 %v1076
    %1142 = vmatprep.subr.bf16.mxu0 %v1079
    %1143 = vmatpush1.bf16.msra.mxu0 %v1078
    %1144 = vmatprep.subr.bf16.mxu0 %v1081
    %1145 = vmatpush1.bf16.msra.mxu0 %v1080
    %1146 = vmatprep.subr.bf16.mxu0 %v1083
    %1147 = vmatpush1.bf16.msra.mxu0 %v1082
    %1148 = vmatprep.subr.bf16.mxu0 %v1085
    %1149 = vmatpush1.bf16.msra.mxu0 %v1084
    %1150 = vmatprep.subr.bf16.mxu0 %v1087
    %1151 = vmatpush1.bf16.msra.mxu0 %v1086
    %1152 = vmatprep.subr.bf16.mxu0 %v1089
    %1153 = vmatpush1.bf16.msra.mxu0 %v1088
    %1154 = vmatprep.subr.bf16.mxu0 %v1091
    %1155 = vmatpush1.bf16.msra.mxu0 %v1090
    %1156 = vmatprep.subr.bf16.mxu0 %v1093
    %1157 = vmatpush1.bf16.msra.mxu0 %v1092
    %1158 = vmatprep.subr.bf16.mxu0 %v1095
    %1159 = vmatpush1.bf16.msra.mxu0 %v1094
    %1160 = vmatprep.subr.bf16.mxu0 %v1097
    %1161 = vmatpush1.bf16.msra.mxu0 %v1096
    %1162 = vmatprep.subr.bf16.mxu0 %v1099
    %1163 = vmatpush1.bf16.msra.mxu0 %v1098
    %1164 = vmatprep.mubr.bf16.mxu0 %v928
    %1165 = vmatmul.mubr.bf16.gmra.mrb[0].mxu0 %v927
    %v1166 = vpop.f32.mrb[0].mxu0
    %v1167 = vadd.f32 0.0, %v1166
    %v1168 = vpop.f32.mrb[0].mxu0
    %v1169 = vadd.f32 0.0, %v1168
    %v1170 = vpop.f32.mrb[0].mxu0
    %v1171 = vadd.f32 0.0, %v1170
    %v1172 = vpop.f32.mrb[0].mxu0
    %v1173 = vadd.f32 0.0, %v1172
    %1174 = vdwg.mxu0
    %v1175 = vadd.f32 %v936, %v1167
    %v1176 = vadd.f32 %v937, %v1169
    %v1177 = vadd.f32 %v938, %v1171
    %v1178 = vadd.f32 %v939, %v1173
    %v1179 = vtanh.pop %v1175
    %v1180 = vtanh.pop %v1176
    %v1181 = vtanh.pop %v1177
    %v1182 = vtanh.pop %v1178
    %v1183 = vpack.c.bf16 %v1181, %v1179
    %v1184 = vpack.c.bf16 %v1182, %v1180
    %1185 = vst [vmem:[%s933] sm:$0xff] %v1183
    %1186 = vst [vmem:[%s933 + $0x8] sm:$0xff] %v1184
    %s1187 = smul.u32 3, 2
    %s1188 = smul.addr %s1187, 8
    %s1189 = scalar_lea.vmem [#allocation2], %s1188
    %v1190 = vld [vmem:[%s1189] sm:$0xff]
    %v1191 = vld [vmem:[%s1189 + $0x8] sm:$0xff]
    %v1192 = vunpack.c.l.bf16 %v1190
    %v1193 = vunpack.c.l.bf16 %v1191
    %v1194 = vunpack.c.h.bf16 %v1190
    %v1195 = vunpack.c.h.bf16 %v1191
    %v1196 = vld [vmem:[#allocation9] sm:$0xff]
    %v1197 = vld [vmem:[#allocation9 + $0x8] sm:$0xff]
    %v1198 = vld [vmem:[#allocation9 + $0x10] sm:$0xff]
    %v1199 = vld [vmem:[#allocation9 + $0x18] sm:$0xff]
    %v1200 = vld [vmem:[#allocation9 + $0x20] sm:$0xff]
    %v1201 = vld [vmem:[#allocation9 + $0x28] sm:$0xff]
    %v1202 = vld [vmem:[#allocation9 + $0x30] sm:$0xff]
    %v1203 = vld [vmem:[#allocation9 + $0x38] sm:$0xff]
    %v1204 = vld [vmem:[#allocation9 + $0x40] sm:$0xff]
    %v1205 = vld [vmem:[#allocation9 + $0x48] sm:$0xff]
    %v1206 = vld [vmem:[#allocation9 + $0x50] sm:$0xff]
    %v1207 = vld [vmem:[#allocation9 + $0x58] sm:$0xff]
    %v1208 = vld [vmem:[#allocation9 + $0x60] sm:$0xff]
    %v1209 = vld [vmem:[#allocation9 + $0x68] sm:$0xff]
    %v1210 = vld [vmem:[#allocation9 + $0x70] sm:$0xff]
    %v1211 = vld [vmem:[#allocation9 + $0x78] sm:$0xff]
    %v1212 = vld [vmem:[#allocation9 + $0x80] sm:$0xff]
    %v1213 = vld [vmem:[#allocation9 + $0x88] sm:$0xff]
    %v1214 = vld [vmem:[#allocation9 + $0x90] sm:$0xff]
    %v1215 = vld [vmem:[#allocation9 + $0x98] sm:$0xff]
    %v1216 = vld [vmem:[#allocation9 + $0xa0] sm:$0xff]
    %v1217 = vld [vmem:[#allocation9 + $0xa8] sm:$0xff]
    %v1218 = vld [vmem:[#allocation9 + $0xb0] sm:$0xff]
    %v1219 = vld [vmem:[#allocation9 + $0xb8] sm:$0xff]
    %v1220 = vld [vmem:[#allocation9 + $0xc0] sm:$0xff]
    %v1221 = vld [vmem:[#allocation9 + $0xc8] sm:$0xff]
    %v1222 = vld [vmem:[#allocation9 + $0xd0] sm:$0xff]
    %v1223 = vld [vmem:[#allocation9 + $0xd8] sm:$0xff]
    %v1224 = vld [vmem:[#allocation9 + $0xe0] sm:$0xff]
    %v1225 = vld [vmem:[#allocation9 + $0xe8] sm:$0xff]
    %v1226 = vld [vmem:[#allocation9 + $0xf0] sm:$0xff]
    %v1227 = vld [vmem:[#allocation9 + $0xf8] sm:$0xff]
    %v1260 = vunpack.c.l.b16 %v1196
    %v1261 = vunpack.c.h.b16 %v1196
    %v1262 = vunpack.c.l.b16 %v1197
    %v1263 = vunpack.c.h.b16 %v1197
    %v1264 = vunpack.c.l.b16 %v1198
    %v1265 = vunpack.c.h.b16 %v1198
    %v1266 = vunpack.c.l.b16 %v1199
    %v1267 = vunpack.c.h.b16 %v1199
    %v1268 = vunpack.c.l.b16 %v1200
    %v1269 = vunpack.c.h.b16 %v1200
    %v1270 = vunpack.c.l.b16 %v1201
    %v1271 = vunpack.c.h.b16 %v1201
    %v1272 = vunpack.c.l.b16 %v1202
    %v1273 = vunpack.c.h.b16 %v1202
    %v1274 = vunpack.c.l.b16 %v1203
    %v1275 = vunpack.c.h.b16 %v1203
    %v1276 = vunpack.c.l.b16 %v1204
    %v1277 = vunpack.c.h.b16 %v1204
    %v1278 = vunpack.c.l.b16 %v1205
    %v1279 = vunpack.c.h.b16 %v1205
    %v1280 = vunpack.c.l.b16 %v1206
    %v1281 = vunpack.c.h.b16 %v1206
    %v1282 = vunpack.c.l.b16 %v1207
    %v1283 = vunpack.c.h.b16 %v1207
    %v1284 = vunpack.c.l.b16 %v1208
    %v1285 = vunpack.c.h.b16 %v1208
    %v1286 = vunpack.c.l.b16 %v1209
    %v1287 = vunpack.c.h.b16 %v1209
    %v1288 = vunpack.c.l.b16 %v1210
    %v1289 = vunpack.c.h.b16 %v1210
    %v1290 = vunpack.c.l.b16 %v1211
    %v1291 = vunpack.c.h.b16 %v1211
    %v1292 = vunpack.c.l.b16 %v1212
    %v1293 = vunpack.c.h.b16 %v1212
    %v1294 = vunpack.c.l.b16 %v1213
    %v1295 = vunpack.c.h.b16 %v1213
    %v1296 = vunpack.c.l.b16 %v1214
    %v1297 = vunpack.c.h.b16 %v1214
    %v1298 = vunpack.c.l.b16 %v1215
    %v1299 = vunpack.c.h.b16 %v1215
    %v1300 = vunpack.c.l.b16 %v1216
    %v1301 = vunpack.c.h.b16 %v1216
    %v1302 = vunpack.c.l.b16 %v1217
    %v1303 = vunpack.c.h.b16 %v1217
    %v1304 = vunpack.c.l.b16 %v1218
    %v1305 = vunpack.c.h.b16 %v1218
    %v1306 = vunpack.c.l.b16 %v1219
    %v1307 = vunpack.c.h.b16 %v1219
    %v1308 = vunpack.c.l.b16 %v1220
    %v1309 = vunpack.c.h.b16 %v1220
    %v1310 = vunpack.c.l.b16 %v1221
    %v1311 = vunpack.c.h.b16 %v1221
    %v1312 = vunpack.c.l.b16 %v1222
    %v1313 = vunpack.c.h.b16 %v1222
    %v1314 = vunpack.c.l.b16 %v1223
    %v1315 = vunpack.c.h.b16 %v1223
    %v1316 = vunpack.c.l.b16 %v1224
    %v1317 = vunpack.c.h.b16 %v1224
    %v1318 = vunpack.c.l.b16 %v1225
    %v1319 = vunpack.c.h.b16 %v1225
    %v1320 = vunpack.c.l.b16 %v1226
    %v1321 = vunpack.c.h.b16 %v1226
    %v1322 = vunpack.c.l.b16 %v1227
    %v1323 = vunpack.c.h.b16 %v1227
    %v1324 = vpack.c.b16 %v1262, %v1260
    %v1325 = vpack.c.b16 %v1263, %v1261
    %v1326 = vpack.c.b16 %v1266, %v1264
    %v1327 = vpack.c.b16 %v1267, %v1265
    %v1328 = vpack.c.b16 %v1270, %v1268
    %v1329 = vpack.c.b16 %v1271, %v1269
    %v1330 = vpack.c.b16 %v1274, %v1272
    %v1331 = vpack.c.b16 %v1275, %v1273
    %v1332 = vpack.c.b16 %v1278, %v1276
    %v1333 = vpack.c.b16 %v1279, %v1277
    %v1334 = vpack.c.b16 %v1282, %v1280
    %v1335 = vpack.c.b16 %v1283, %v1281
    %v1336 = vpack.c.b16 %v1286, %v1284
    %v1337 = vpack.c.b16 %v1287, %v1285
    %v1338 = vpack.c.b16 %v1290, %v1288
    %v1339 = vpack.c.b16 %v1291, %v1289
    %v1340 = vpack.c.b16 %v1294, %v1292
    %v1341 = vpack.c.b16 %v1295, %v1293
    %v1342 = vpack.c.b16 %v1298, %v1296
    %v1343 = vpack.c.b16 %v1299, %v1297
    %v1344 = vpack.c.b16 %v1302, %v1300
    %v1345 = vpack.c.b16 %v1303, %v1301
    %v1346 = vpack.c.b16 %v1306, %v1304
    %v1347 = vpack.c.b16 %v1307, %v1305
    %v1348 = vpack.c.b16 %v1310, %v1308
    %v1349 = vpack.c.b16 %v1311, %v1309
    %v1350 = vpack.c.b16 %v1314, %v1312
    %v1351 = vpack.c.b16 %v1315, %v1313
    %v1352 = vpack.c.b16 %v1318, %v1316
    %v1353 = vpack.c.b16 %v1319, %v1317
    %v1354 = vpack.c.b16 %v1322, %v1320
    %v1355 = vpack.c.b16 %v1323, %v1321
    %1388 = vmatprep.subr.bf16.mxu0 %v1325
    %1389 = vmatpush1.bf16.msra.mxu0 %v1324
    %1390 = vmatprep.subr.bf16.mxu0 %v1327
    %1391 = vmatpush1.bf16.msra.mxu0 %v1326
    %1392 = vmatprep.subr.bf16.mxu0 %v1329
    %1393 = vmatpush1.bf16.msra.mxu0 %v1328
    %1394 = vmatprep.subr.bf16.mxu0 %v1331
    %1395 = vmatpush1.bf16.msra.mxu0 %v1330
    %1396 = vmatprep.subr.bf16.mxu0 %v1333
    %1397 = vmatpush1.bf16.msra.mxu0 %v1332
    %1398 = vmatprep.subr.bf16.mxu0 %v1335
    %1399 = vmatpush1.bf16.msra.mxu0 %v1334
    %1400 = vmatprep.subr.bf16.mxu0 %v1337
    %1401 = vmatpush1.bf16.msra.mxu0 %v1336
    %1402 = vmatprep.subr.bf16.mxu0 %v1339
    %1403 = vmatpush1.bf16.msra.mxu0 %v1338
    %1404 = vmatprep.subr.bf16.mxu0 %v1341
    %1405 = vmatpush1.bf16.msra.mxu0 %v1340
    %1406 = vmatprep.subr.bf16.mxu0 %v1343
    %1407 = vmatpush1.bf16.msra.mxu0 %v1342
    %1408 = vmatprep.subr.bf16.mxu0 %v1345
    %1409 = vmatpush1.bf16.msra.mxu0 %v1344
    %1410 = vmatprep.subr.bf16.mxu0 %v1347
    %1411 = vmatpush1.bf16.msra.mxu0 %v1346
    %1412 = vmatprep.subr.bf16.mxu0 %v1349
    %1413 = vmatpush1.bf16.msra.mxu0 %v1348
    %1414 = vmatprep.subr.bf16.mxu0 %v1351
    %1415 = vmatpush1.bf16.msra.mxu0 %v1350
    %1416 = vmatprep.subr.bf16.mxu0 %v1353
    %1417 = vmatpush1.bf16.msra.mxu0 %v1352
    %1418 = vmatprep.subr.bf16.mxu0 %v1355
    %1419 = vmatpush1.bf16.msra.mxu0 %v1354
    %1420 = vmatprep.mubr.bf16.mxu0 %v1184
    %1421 = vmatmul.mubr.bf16.gmra.mrb[0].mxu0 %v1183
    %v1422 = vpop.f32.mrb[0].mxu0
    %v1423 = vadd.f32 0.0, %v1422
    %v1424 = vpop.f32.mrb[0].mxu0
    %v1425 = vadd.f32 0.0, %v1424
    %v1426 = vpop.f32.mrb[0].mxu0
    %v1427 = vadd.f32 0.0, %v1426
    %v1428 = vpop.f32.mrb[0].mxu0
    %v1429 = vadd.f32 0.0, %v1428
    %1430 = vdwg.mxu0
    %v1431 = vadd.f32 %v1192, %v1423
    %v1432 = vadd.f32 %v1193, %v1425
    %v1433 = vadd.f32 %v1194, %v1427
    %v1434 = vadd.f32 %v1195, %v1429
    %v1435 = vtanh.pop %v1431
    %v1436 = vtanh.pop %v1432
    %v1437 = vtanh.pop %v1433
    %v1438 = vtanh.pop %v1434
    %v1439 = vpack.c.bf16 %v1437, %v1435
    %v1440 = vpack.c.bf16 %v1438, %v1436
    %1441 = vst [vmem:[%s1189] sm:$0xff] %v1439
    %1442 = vst [vmem:[%s1189 + $0x8] sm:$0xff] %v1440
    %s1443 = smul.u32 4, 2
    %s1444 = smul.addr %s1443, 8
    %s1445 = scalar_lea.vmem [#allocation2], %s1444
    %v1446 = vld [vmem:[%s1445] sm:$0xff]
    %v1447 = vld [vmem:[%s1445 + $0x8] sm:$0xff]
    %v1448 = vunpack.c.l.bf16 %v1446
    %v1449 = vunpack.c.l.bf16 %v1447
    %v1450 = vunpack.c.h.bf16 %v1446
    %v1451 = vunpack.c.h.bf16 %v1447
    %v1452 = vld [vmem:[#allocation9] sm:$0xff]
    %v1453 = vld [vmem:[#allocation9 + $0x8] sm:$0xff]
    %v1454 = vld [vmem:[#allocation9 + $0x10] sm:$0xff]
    %v1455 = vld [vmem:[#allocation9 + $0x18] sm:$0xff]
    %v1456 = vld [vmem:[#allocation9 + $0x20] sm:$0xff]
    %v1457 = vld [vmem:[#allocation9 + $0x28] sm:$0xff]
    %v1458 = vld [vmem:[#allocation9 + $0x30] sm:$0xff]
    %v1459 = vld [vmem:[#allocation9 + $0x38] sm:$0xff]
    %v1460 = vld [vmem:[#allocation9 + $0x40] sm:$0xff]
    %v1461 = vld [vmem:[#allocation9 + $0x48] sm:$0xff]
    %v1462 = vld [vmem:[#allocation9 + $0x50] sm:$0xff]
    %v1463 = vld [vmem:[#allocation9 + $0x58] sm:$0xff]
    %v1464 = vld [vmem:[#allocation9 + $0x60] sm:$0xff]
    %v1465 = vld [vmem:[#allocation9 + $0x68] sm:$0xff]
    %v1466 = vld [vmem:[#allocation9 + $0x70] sm:$0xff]
    %v1467 = vld [vmem:[#allocation9 + $0x78] sm:$0xff]
    %v1468 = vld [vmem:[#allocation9 + $0x80] sm:$0xff]
    %v1469 = vld [vmem:[#allocation9 + $0x88] sm:$0xff]
    %v1470 = vld [vmem:[#allocation9 + $0x90] sm:$0xff]
    %v1471 = vld [vmem:[#allocation9 + $0x98] sm:$0xff]
    %v1472 = vld [vmem:[#allocation9 + $0xa0] sm:$0xff]
    %v1473 = vld [vmem:[#allocation9 + $0xa8] sm:$0xff]
    %v1474 = vld [vmem:[#allocation9 + $0xb0] sm:$0xff]
    %v1475 = vld [vmem:[#allocation9 + $0xb8] sm:$0xff]
    %v1476 = vld [vmem:[#allocation9 + $0xc0] sm:$0xff]
    %v1477 = vld [vmem:[#allocation9 + $0xc8] sm:$0xff]
    %v1478 = vld [vmem:[#allocation9 + $0xd0] sm:$0xff]
    %v1479 = vld [vmem:[#allocation9 + $0xd8] sm:$0xff]
    %v1480 = vld [vmem:[#allocation9 + $0xe0] sm:$0xff]
    %v1481 = vld [vmem:[#allocation9 + $0xe8] sm:$0xff]
    %v1482 = vld [vmem:[#allocation9 + $0xf0] sm:$0xff]
    %v1483 = vld [vmem:[#allocation9 + $0xf8] sm:$0xff]
    %v1516 = vunpack.c.l.b16 %v1452
    %v1517 = vunpack.c.h.b16 %v1452
    %v1518 = vunpack.c.l.b16 %v1453
    %v1519 = vunpack.c.h.b16 %v1453
    %v1520 = vunpack.c.l.b16 %v1454
    %v1521 = vunpack.c.h.b16 %v1454
    %v1522 = vunpack.c.l.b16 %v1455
    %v1523 = vunpack.c.h.b16 %v1455
    %v1524 = vunpack.c.l.b16 %v1456
    %v1525 = vunpack.c.h.b16 %v1456
    %v1526 = vunpack.c.l.b16 %v1457
    %v1527 = vunpack.c.h.b16 %v1457
    %v1528 = vunpack.c.l.b16 %v1458
    %v1529 = vunpack.c.h.b16 %v1458
    %v1530 = vunpack.c.l.b16 %v1459
    %v1531 = vunpack.c.h.b16 %v1459
    %v1532 = vunpack.c.l.b16 %v1460
    %v1533 = vunpack.c.h.b16 %v1460
    %v1534 = vunpack.c.l.b16 %v1461
    %v1535 = vunpack.c.h.b16 %v1461
    %v1536 = vunpack.c.l.b16 %v1462
    %v1537 = vunpack.c.h.b16 %v1462
    %v1538 = vunpack.c.l.b16 %v1463
    %v1539 = vunpack.c.h.b16 %v1463
    %v1540 = vunpack.c.l.b16 %v1464
    %v1541 = vunpack.c.h.b16 %v1464
    %v1542 = vunpack.c.l.b16 %v1465
    %v1543 = vunpack.c.h.b16 %v1465
    %v1544 = vunpack.c.l.b16 %v1466
    %v1545 = vunpack.c.h.b16 %v1466
    %v1546 = vunpack.c.l.b16 %v1467
    %v1547 = vunpack.c.h.b16 %v1467
    %v1548 = vunpack.c.l.b16 %v1468
    %v1549 = vunpack.c.h.b16 %v1468
    %v1550 = vunpack.c.l.b16 %v1469
    %v1551 = vunpack.c.h.b16 %v1469
    %v1552 = vunpack.c.l.b16 %v1470
    %v1553 = vunpack.c.h.b16 %v1470
    %v1554 = vunpack.c.l.b16 %v1471
    %v1555 = vunpack.c.h.b16 %v1471
    %v1556 = vunpack.c.l.b16 %v1472
    %v1557 = vunpack.c.h.b16 %v1472
    %v1558 = vunpack.c.l.b16 %v1473
    %v1559 = vunpack.c.h.b16 %v1473
    %v1560 = vunpack.c.l.b16 %v1474
    %v1561 = vunpack.c.h.b16 %v1474
    %v1562 = vunpack.c.l.b16 %v1475
    %v1563 = vunpack.c.h.b16 %v1475
    %v1564 = vunpack.c.l.b16 %v1476
    %v1565 = vunpack.c.h.b16 %v1476
    %v1566 = vunpack.c.l.b16 %v1477
    %v1567 = vunpack.c.h.b16 %v1477
    %v1568 = vunpack.c.l.b16 %v1478
    %v1569 = vunpack.c.h.b16 %v1478
    %v1570 = vunpack.c.l.b16 %v1479
    %v1571 = vunpack.c.h.b16 %v1479
    %v1572 = vunpack.c.l.b16 %v1480
    %v1573 = vunpack.c.h.b16 %v1480
    %v1574 = vunpack.c.l.b16 %v1481
    %v1575 = vunpack.c.h.b16 %v1481
    %v1576 = vunpack.c.l.b16 %v1482
    %v1577 = vunpack.c.h.b16 %v1482
    %v1578 = vunpack.c.l.b16 %v1483
    %v1579 = vunpack.c.h.b16 %v1483
    %v1580 = vpack.c.b16 %v1518, %v1516
    %v1581 = vpack.c.b16 %v1519, %v1517
    %v1582 = vpack.c.b16 %v1522, %v1520
    %v1583 = vpack.c.b16 %v1523, %v1521
    %v1584 = vpack.c.b16 %v1526, %v1524
    %v1585 = vpack.c.b16 %v1527, %v1525
    %v1586 = vpack.c.b16 %v1530, %v1528
    %v1587 = vpack.c.b16 %v1531, %v1529
    %v1588 = vpack.c.b16 %v1534, %v1532
    %v1589 = vpack.c.b16 %v1535, %v1533
    %v1590 = vpack.c.b16 %v1538, %v1536
    %v1591 = vpack.c.b16 %v1539, %v1537
    %v1592 = vpack.c.b16 %v1542, %v1540
    %v1593 = vpack.c.b16 %v1543, %v1541
    %v1594 = vpack.c.b16 %v1546, %v1544
    %v1595 = vpack.c.b16 %v1547, %v1545
    %v1596 = vpack.c.b16 %v1550, %v1548
    %v1597 = vpack.c.b16 %v1551, %v1549
    %v1598 = vpack.c.b16 %v1554, %v1552
    %v1599 = vpack.c.b16 %v1555, %v1553
    %v1600 = vpack.c.b16 %v1558, %v1556
    %v1601 = vpack.c.b16 %v1559, %v1557
    %v1602 = vpack.c.b16 %v1562, %v1560
    %v1603 = vpack.c.b16 %v1563, %v1561
    %v1604 = vpack.c.b16 %v1566, %v1564
    %v1605 = vpack.c.b16 %v1567, %v1565
    %v1606 = vpack.c.b16 %v1570, %v1568
    %v1607 = vpack.c.b16 %v1571, %v1569
    %v1608 = vpack.c.b16 %v1574, %v1572
    %v1609 = vpack.c.b16 %v1575, %v1573
    %v1610 = vpack.c.b16 %v1578, %v1576
    %v1611 = vpack.c.b16 %v1579, %v1577
    %1644 = vmatprep.subr.bf16.mxu0 %v1581
    %1645 = vmatpush1.bf16.msra.mxu0 %v1580
    %1646 = vmatprep.subr.bf16.mxu0 %v1583
    %1647 = vmatpush1.bf16.msra.mxu0 %v1582
    %1648 = vmatprep.subr.bf16.mxu0 %v1585
    %1649 = vmatpush1.bf16.msra.mxu0 %v1584
    %1650 = vmatprep.subr.bf16.mxu0 %v1587
    %1651 = vmatpush1.bf16.msra.mxu0 %v1586
    %1652 = vmatprep.subr.bf16.mxu0 %v1589
    %1653 = vmatpush1.bf16.msra.mxu0 %v1588
    %1654 = vmatprep.subr.bf16.mxu0 %v1591
    %1655 = vmatpush1.bf16.msra.mxu0 %v1590
    %1656 = vmatprep.subr.bf16.mxu0 %v1593
    %1657 = vmatpush1.bf16.msra.mxu0 %v1592
    %1658 = vmatprep.subr.bf16.mxu0 %v1595
    %1659 = vmatpush1.bf16.msra.mxu0 %v1594
    %1660 = vmatprep.subr.bf16.mxu0 %v1597
    %1661 = vmatpush1.bf16.msra.mxu0 %v1596
    %1662 = vmatprep.subr.bf16.mxu0 %v1599
    %1663 = vmatpush1.bf16.msra.mxu0 %v1598
    %1664 = vmatprep.subr.bf16.mxu0 %v1601
    %1665 = vmatpush1.bf16.msra.mxu0 %v1600
    %1666 = vmatprep.subr.bf16.mxu0 %v1603
    %1667 = vmatpush1.bf16.msra.mxu0 %v1602
    %1668 = vmatprep.subr.bf16.mxu0 %v1605
    %1669 = vmatpush1.bf16.msra.mxu0 %v1604
    %1670 = vmatprep.subr.bf16.mxu0 %v1607
    %1671 = vmatpush1.bf16.msra.mxu0 %v1606
    %1672 = vmatprep.subr.bf16.mxu0 %v1609
    %1673 = vmatpush1.bf16.msra.mxu0 %v1608
    %1674 = vmatprep.subr.bf16.mxu0 %v1611
    %1675 = vmatpush1.bf16.msra.mxu0 %v1610
    %1676 = vmatprep.mubr.bf16.mxu0 %v1440
    %1677 = vmatmul.mubr.bf16.gmra.mrb[0].mxu0 %v1439
    %v1678 = vpop.f32.mrb[0].mxu0
    %v1679 = vadd.f32 0.0, %v1678
    %v1680 = vpop.f32.mrb[0].mxu0
    %v1681 = vadd.f32 0.0, %v1680
    %v1682 = vpop.f32.mrb[0].mxu0
    %v1683 = vadd.f32 0.0, %v1682
    %v1684 = vpop.f32.mrb[0].mxu0
    %v1685 = vadd.f32 0.0, %v1684
    %1686 = vdwg.mxu0
    %v1687 = vadd.f32 %v1448, %v1679
    %v1688 = vadd.f32 %v1449, %v1681
    %v1689 = vadd.f32 %v1450, %v1683
    %v1690 = vadd.f32 %v1451, %v1685
    %v1691 = vtanh.pop %v1687
    %v1692 = vtanh.pop %v1688
    %v1693 = vtanh.pop %v1689
    %v1694 = vtanh.pop %v1690
    %v1695 = vpack.c.bf16 %v1693, %v1691
    %v1696 = vpack.c.bf16 %v1694, %v1692
    %1697 = vst [vmem:[%s1445] sm:$0xff] %v1695
    %1698 = vst [vmem:[%s1445 + $0x8] sm:$0xff] %v1696
    %s1699 = smul.u32 5, 2
    %s1700 = smul.addr %s1699, 8
    %s1701 = scalar_lea.vmem [#allocation2], %s1700
    %v1702 = vld [vmem:[%s1701] sm:$0xff]
    %v1703 = vld [vmem:[%s1701 + $0x8] sm:$0xff]
    %v1704 = vunpack.c.l.bf16 %v1702
    %v1705 = vunpack.c.l.bf16 %v1703
    %v1706 = vunpack.c.h.bf16 %v1702
    %v1707 = vunpack.c.h.bf16 %v1703
    %v1708 = vld [vmem:[#allocation9] sm:$0xff]
    %v1709 = vld [vmem:[#allocation9 + $0x8] sm:$0xff]
    %v1710 = vld [vmem:[#allocation9 + $0x10] sm:$0xff]
    %v1711 = vld [vmem:[#allocation9 + $0x18] sm:$0xff]
    %v1712 = vld [vmem:[#allocation9 + $0x20] sm:$0xff]
    %v1713 = vld [vmem:[#allocation9 + $0x28] sm:$0xff]
    %v1714 = vld [vmem:[#allocation9 + $0x30] sm:$0xff]
    %v1715 = vld [vmem:[#allocation9 + $0x38] sm:$0xff]
    %v1716 = vld [vmem:[#allocation9 + $0x40] sm:$0xff]
    %v1717 = vld [vmem:[#allocation9 + $0x48] sm:$0xff]
    %v1718 = vld [vmem:[#allocation9 + $0x50] sm:$0xff]
    %v1719 = vld [vmem:[#allocation9 + $0x58] sm:$0xff]
    %v1720 = vld [vmem:[#allocation9 + $0x60] sm:$0xff]
    %v1721 = vld [vmem:[#allocation9 + $0x68] sm:$0xff]
    %v1722 = vld [vmem:[#allocation9 + $0x70] sm:$0xff]
    %v1723 = vld [vmem:[#allocation9 + $0x78] sm:$0xff]
    %v1724 = vld [vmem:[#allocation9 + $0x80] sm:$0xff]
    %v1725 = vld [vmem:[#allocation9 + $0x88] sm:$0xff]
    %v1726 = vld [vmem:[#allocation9 + $0x90] sm:$0xff]
    %v1727 = vld [vmem:[#allocation9 + $0x98] sm:$0xff]
    %v1728 = vld [vmem:[#allocation9 + $0xa0] sm:$0xff]
    %v1729 = vld [vmem:[#allocation9 + $0xa8] sm:$0xff]
    %v1730 = vld [vmem:[#allocation9 + $0xb0] sm:$0xff]
    %v1731 = vld [vmem:[#allocation9 + $0xb8] sm:$0xff]
    %v1732 = vld [vmem:[#allocation9 + $0xc0] sm:$0xff]
    %v1733 = vld [vmem:[#allocation9 + $0xc8] sm:$0xff]
    %v1734 = vld [vmem:[#allocation9 + $0xd0] sm:$0xff]
    %v1735 = vld [vmem:[#allocation9 + $0xd8] sm:$0xff]
    %v1736 = vld [vmem:[#allocation9 + $0xe0] sm:$0xff]
    %v1737 = vld [vmem:[#allocation9 + $0xe8] sm:$0xff]
    %v1738 = vld [vmem:[#allocation9 + $0xf0] sm:$0xff]
    %v1739 = vld [vmem:[#allocation9 + $0xf8] sm:$0xff]
    %v1772 = vunpack.c.l.b16 %v1708
    %v1773 = vunpack.c.h.b16 %v1708
    %v1774 = vunpack.c.l.b16 %v1709
    %v1775 = vunpack.c.h.b16 %v1709
    %v1776 = vunpack.c.l.b16 %v1710
    %v1777 = vunpack.c.h.b16 %v1710
    %v1778 = vunpack.c.l.b16 %v1711
    %v1779 = vunpack.c.h.b16 %v1711
    %v1780 = vunpack.c.l.b16 %v1712
    %v1781 = vunpack.c.h.b16 %v1712
    %v1782 = vunpack.c.l.b16 %v1713
    %v1783 = vunpack.c.h.b16 %v1713
    %v1784 = vunpack.c.l.b16 %v1714
    %v1785 = vunpack.c.h.b16 %v1714
    %v1786 = vunpack.c.l.b16 %v1715
    %v1787 = vunpack.c.h.b16 %v1715
    %v1788 = vunpack.c.l.b16 %v1716
    %v1789 = vunpack.c.h.b16 %v1716
    %v1790 = vunpack.c.l.b16 %v1717
    %v1791 = vunpack.c.h.b16 %v1717
    %v1792 = vunpack.c.l.b16 %v1718
    %v1793 = vunpack.c.h.b16 %v1718
    %v1794 = vunpack.c.l.b16 %v1719
    %v1795 = vunpack.c.h.b16 %v1719
    %v1796 = vunpack.c.l.b16 %v1720
    %v1797 = vunpack.c.h.b16 %v1720
    %v1798 = vunpack.c.l.b16 %v1721
    %v1799 = vunpack.c.h.b16 %v1721
    %v1800 = vunpack.c.l.b16 %v1722
    %v1801 = vunpack.c.h.b16 %v1722
    %v1802 = vunpack.c.l.b16 %v1723
    %v1803 = vunpack.c.h.b16 %v1723
    %v1804 = vunpack.c.l.b16 %v1724
    %v1805 = vunpack.c.h.b16 %v1724
    %v1806 = vunpack.c.l.b16 %v1725
    %v1807 = vunpack.c.h.b16 %v1725
    %v1808 = vunpack.c.l.b16 %v1726
    %v1809 = vunpack.c.h.b16 %v1726
    %v1810 = vunpack.c.l.b16 %v1727
    %v1811 = vunpack.c.h.b16 %v1727
    %v1812 = vunpack.c.l.b16 %v1728
    %v1813 = vunpack.c.h.b16 %v1728
    %v1814 = vunpack.c.l.b16 %v1729
    %v1815 = vunpack.c.h.b16 %v1729
    %v1816 = vunpack.c.l.b16 %v1730
    %v1817 = vunpack.c.h.b16 %v1730
    %v1818 = vunpack.c.l.b16 %v1731
    %v1819 = vunpack.c.h.b16 %v1731
    %v1820 = vunpack.c.l.b16 %v1732
    %v1821 = vunpack.c.h.b16 %v1732
    %v1822 = vunpack.c.l.b16 %v1733
    %v1823 = vunpack.c.h.b16 %v1733
    %v1824 = vunpack.c.l.b16 %v1734
    %v1825 = vunpack.c.h.b16 %v1734
    %v1826 = vunpack.c.l.b16 %v1735
    %v1827 = vunpack.c.h.b16 %v1735
    %v1828 = vunpack.c.l.b16 %v1736
    %v1829 = vunpack.c.h.b16 %v1736
    %v1830 = vunpack.c.l.b16 %v1737
    %v1831 = vunpack.c.h.b16 %v1737
    %v1832 = vunpack.c.l.b16 %v1738
    %v1833 = vunpack.c.h.b16 %v1738
    %v1834 = vunpack.c.l.b16 %v1739
    %v1835 = vunpack.c.h.b16 %v1739
    %v1836 = vpack.c.b16 %v1774, %v1772
    %v1837 = vpack.c.b16 %v1775, %v1773
    %v1838 = vpack.c.b16 %v1778, %v1776
    %v1839 = vpack.c.b16 %v1779, %v1777
    %v1840 = vpack.c.b16 %v1782, %v1780
    %v1841 = vpack.c.b16 %v1783, %v1781
    %v1842 = vpack.c.b16 %v1786, %v1784
    %v1843 = vpack.c.b16 %v1787, %v1785
    %v1844 = vpack.c.b16 %v1790, %v1788
    %v1845 = vpack.c.b16 %v1791, %v1789
    %v1846 = vpack.c.b16 %v1794, %v1792
    %v1847 = vpack.c.b16 %v1795, %v1793
    %v1848 = vpack.c.b16 %v1798, %v1796
    %v1849 = vpack.c.b16 %v1799, %v1797
    %v1850 = vpack.c.b16 %v1802, %v1800
    %v1851 = vpack.c.b16 %v1803, %v1801
    %v1852 = vpack.c.b16 %v1806, %v1804
    %v1853 = vpack.c.b16 %v1807, %v1805
    %v1854 = vpack.c.b16 %v1810, %v1808
    %v1855 = vpack.c.b16 %v1811, %v1809
    %v1856 = vpack.c.b16 %v1814, %v1812
    %v1857 = vpack.c.b16 %v1815, %v1813
    %v1858 = vpack.c.b16 %v1818, %v1816
    %v1859 = vpack.c.b16 %v1819, %v1817
    %v1860 = vpack.c.b16 %v1822, %v1820
    %v1861 = vpack.c.b16 %v1823, %v1821
    %v1862 = vpack.c.b16 %v1826, %v1824
    %v1863 = vpack.c.b16 %v1827, %v1825
    %v1864 = vpack.c.b16 %v1830, %v1828
    %v1865 = vpack.c.b16 %v1831, %v1829
    %v1866 = vpack.c.b16 %v1834, %v1832
    %v1867 = vpack.c.b16 %v1835, %v1833
    %1900 = vmatprep.subr.bf16.mxu0 %v1837
    %1901 = vmatpush1.bf16.msra.mxu0 %v1836
    %1902 = vmatprep.subr.bf16.mxu0 %v1839
    %1903 = vmatpush1.bf16.msra.mxu0 %v1838
    %1904 = vmatprep.subr.bf16.mxu0 %v1841
    %1905 = vmatpush1.bf16.msra.mxu0 %v1840
    %1906 = vmatprep.subr.bf16.mxu0 %v1843
    %1907 = vmatpush1.bf16.msra.mxu0 %v1842
    %1908 = vmatprep.subr.bf16.mxu0 %v1845
    %1909 = vmatpush1.bf16.msra.mxu0 %v1844
    %1910 = vmatprep.subr.bf16.mxu0 %v1847
    %1911 = vmatpush1.bf16.msra.mxu0 %v1846
    %1912 = vmatprep.subr.bf16.mxu0 %v1849
    %1913 = vmatpush1.bf16.msra.mxu0 %v1848
    %1914 = vmatprep.subr.bf16.mxu0 %v1851
    %1915 = vmatpush1.bf16.msra.mxu0 %v1850
    %1916 = vmatprep.subr.bf16.mxu0 %v1853
    %1917 = vmatpush1.bf16.msra.mxu0 %v1852
    %1918 = vmatprep.subr.bf16.mxu0 %v1855
    %1919 = vmatpush1.bf16.msra.mxu0 %v1854
    %1920 = vmatprep.subr.bf16.mxu0 %v1857
    %1921 = vmatpush1.bf16.msra.mxu0 %v1856
    %1922 = vmatprep.subr.bf16.mxu0 %v1859
    %1923 = vmatpush1.bf16.msra.mxu0 %v1858
    %1924 = vmatprep.subr.bf16.mxu0 %v1861
    %1925 = vmatpush1.bf16.msra.mxu0 %v1860
    %1926 = vmatprep.subr.bf16.mxu0 %v1863
    %1927 = vmatpush1.bf16.msra.mxu0 %v1862
    %1928 = vmatprep.subr.bf16.mxu0 %v1865
    %1929 = vmatpush1.bf16.msra.mxu0 %v1864
    %1930 = vmatprep.subr.bf16.mxu0 %v1867
    %1931 = vmatpush1.bf16.msra.mxu0 %v1866
    %1932 = vmatprep.mubr.bf16.mxu0 %v1696
    %1933 = vmatmul.mubr.bf16.gmra.mrb[0].mxu0 %v1695
    %v1934 = vpop.f32.mrb[0].mxu0
    %v1935 = vadd.f32 0.0, %v1934
    %v1936 = vpop.f32.mrb[0].mxu0
    %v1937 = vadd.f32 0.0, %v1936
    %v1938 = vpop.f32.mrb[0].mxu0
    %v1939 = vadd.f32 0.0, %v1938
    %v1940 = vpop.f32.mrb[0].mxu0
    %v1941 = vadd.f32 0.0, %v1940
    %1942 = vdwg.mxu0
    %v1943 = vadd.f32 %v1704, %v1935
    %v1944 = vadd.f32 %v1705, %v1937
    %v1945 = vadd.f32 %v1706, %v1939
    %v1946 = vadd.f32 %v1707, %v1941
    %v1947 = vtanh.pop %v1943
    %v1948 = vtanh.pop %v1944
    %v1949 = vtanh.pop %v1945
    %v1950 = vtanh.pop %v1946
    %v1951 = vpack.c.bf16 %v1949, %v1947
    %v1952 = vpack.c.bf16 %v1950, %v1948
    %1953 = vst [vmem:[%s1701] sm:$0xff] %v1951
    %1954 = vst [vmem:[%s1701 + $0x8] sm:$0xff] %v1952
    %s1955 = smul.u32 6, 2
    %s1956 = smul.addr %s1955, 8
    %s1957 = scalar_lea.vmem [#allocation2], %s1956
    %v1958 = vld [vmem:[%s1957] sm:$0xff]
    %v1959 = vld [vmem:[%s1957 + $0x8] sm:$0xff]
    %v1960 = vunpack.c.l.bf16 %v1958
    %v1961 = vunpack.c.l.bf16 %v1959
    %v1962 = vunpack.c.h.bf16 %v1958
    %v1963 = vunpack.c.h.bf16 %v1959
    %v1964 = vld [vmem:[#allocation9] sm:$0xff]
    %v1965 = vld [vmem:[#allocation9 + $0x8] sm:$0xff]
    %v1966 = vld [vmem:[#allocation9 + $0x10] sm:$0xff]
    %v1967 = vld [vmem:[#allocation9 + $0x18] sm:$0xff]
    %v1968 = vld [vmem:[#allocation9 + $0x20] sm:$0xff]
    %v1969 = vld [vmem:[#allocation9 + $0x28] sm:$0xff]
    %v1970 = vld [vmem:[#allocation9 + $0x30] sm:$0xff]
    %v1971 = vld [vmem:[#allocation9 + $0x38] sm:$0xff]
    %v1972 = vld [vmem:[#allocation9 + $0x40] sm:$0xff]
    %v1973 = vld [vmem:[#allocation9 + $0x48] sm:$0xff]
    %v1974 = vld [vmem:[#allocation9 + $0x50] sm:$0xff]
    %v1975 = vld [vmem:[#allocation9 + $0x58] sm:$0xff]
    %v1976 = vld [vmem:[#allocation9 + $0x60] sm:$0xff]
    %v1977 = vld [vmem:[#allocation9 + $0x68] sm:$0xff]
    %v1978 = vld [vmem:[#allocation9 + $0x70] sm:$0xff]
    %v1979 = vld [vmem:[#allocation9 + $0x78] sm:$0xff]
    %v1980 = vld [vmem:[#allocation9 + $0x80] sm:$0xff]
    %v1981 = vld [vmem:[#allocation9 + $0x88] sm:$0xff]
    %v1982 = vld [vmem:[#allocation9 + $0x90] sm:$0xff]
    %v1983 = vld [vmem:[#allocation9 + $0x98] sm:$0xff]
    %v1984 = vld [vmem:[#allocation9 + $0xa0] sm:$0xff]
    %v1985 = vld [vmem:[#allocation9 + $0xa8] sm:$0xff]
    %v1986 = vld [vmem:[#allocation9 + $0xb0] sm:$0xff]
    %v1987 = vld [vmem:[#allocation9 + $0xb8] sm:$0xff]
    %v1988 = vld [vmem:[#allocation9 + $0xc0] sm:$0xff]
    %v1989 = vld [vmem:[#allocation9 + $0xc8] sm:$0xff]
    %v1990 = vld [vmem:[#allocation9 + $0xd0] sm:$0xff]
    %v1991 = vld [vmem:[#allocation9 + $0xd8] sm:$0xff]
    %v1992 = vld [vmem:[#allocation9 + $0xe0] sm:$0xff]
    %v1993 = vld [vmem:[#allocation9 + $0xe8] sm:$0xff]
    %v1994 = vld [vmem:[#allocation9 + $0xf0] sm:$0xff]
    %v1995 = vld [vmem:[#allocation9 + $0xf8] sm:$0xff]
    %v2028 = vunpack.c.l.b16 %v1964
    %v2029 = vunpack.c.h.b16 %v1964
    %v2030 = vunpack.c.l.b16 %v1965
    %v2031 = vunpack.c.h.b16 %v1965
    %v2032 = vunpack.c.l.b16 %v1966
    %v2033 = vunpack.c.h.b16 %v1966
    %v2034 = vunpack.c.l.b16 %v1967
    %v2035 = vunpack.c.h.b16 %v1967
    %v2036 = vunpack.c.l.b16 %v1968
    %v2037 = vunpack.c.h.b16 %v1968
    %v2038 = vunpack.c.l.b16 %v1969
    %v2039 = vunpack.c.h.b16 %v1969
    %v2040 = vunpack.c.l.b16 %v1970
    %v2041 = vunpack.c.h.b16 %v1970
    %v2042 = vunpack.c.l.b16 %v1971
    %v2043 = vunpack.c.h.b16 %v1971
    %v2044 = vunpack.c.l.b16 %v1972
    %v2045 = vunpack.c.h.b16 %v1972
    %v2046 = vunpack.c.l.b16 %v1973
    %v2047 = vunpack.c.h.b16 %v1973
    %v2048 = vunpack.c.l.b16 %v1974
    %v2049 = vunpack.c.h.b16 %v1974
    %v2050 = vunpack.c.l.b16 %v1975
    %v2051 = vunpack.c.h.b16 %v1975
    %v2052 = vunpack.c.l.b16 %v1976
    %v2053 = vunpack.c.h.b16 %v1976
    %v2054 = vunpack.c.l.b16 %v1977
    %v2055 = vunpack.c.h.b16 %v1977
    %v2056 = vunpack.c.l.b16 %v1978
    %v2057 = vunpack.c.h.b16 %v1978
    %v2058 = vunpack.c.l.b16 %v1979
    %v2059 = vunpack.c.h.b16 %v1979
    %v2060 = vunpack.c.l.b16 %v1980
    %v2061 = vunpack.c.h.b16 %v1980
    %v2062 = vunpack.c.l.b16 %v1981
    %v2063 = vunpack.c.h.b16 %v1981
    %v2064 = vunpack.c.l.b16 %v1982
    %v2065 = vunpack.c.h.b16 %v1982
    %v2066 = vunpack.c.l.b16 %v1983
    %v2067 = vunpack.c.h.b16 %v1983
    %v2068 = vunpack.c.l.b16 %v1984
    %v2069 = vunpack.c.h.b16 %v1984
    %v2070 = vunpack.c.l.b16 %v1985
    %v2071 = vunpack.c.h.b16 %v1985
    %v2072 = vunpack.c.l.b16 %v1986
    %v2073 = vunpack.c.h.b16 %v1986
    %v2074 = vunpack.c.l.b16 %v1987
    %v2075 = vunpack.c.h.b16 %v1987
    %v2076 = vunpack.c.l.b16 %v1988
    %v2077 = vunpack.c.h.b16 %v1988
    %v2078 = vunpack.c.l.b16 %v1989
    %v2079 = vunpack.c.h.b16 %v1989
    %v2080 = vunpack.c.l.b16 %v1990
    %v2081 = vunpack.c.h.b16 %v1990
    %v2082 = vunpack.c.l.b16 %v1991
    %v2083 = vunpack.c.h.b16 %v1991
    %v2084 = vunpack.c.l.b16 %v1992
    %v2085 = vunpack.c.h.b16 %v1992
    %v2086 = vunpack.c.l.b16 %v1993
    %v2087 = vunpack.c.h.b16 %v1993
    %v2088 = vunpack.c.l.b16 %v1994
    %v2089 = vunpack.c.h.b16 %v1994
    %v2090 = vunpack.c.l.b16 %v1995
    %v2091 = vunpack.c.h.b16 %v1995
    %v2092 = vpack.c.b16 %v2030, %v2028
    %v2093 = vpack.c.b16 %v2031, %v2029
    %v2094 = vpack.c.b16 %v2034, %v2032
    %v2095 = vpack.c.b16 %v2035, %v2033
    %v2096 = vpack.c.b16 %v2038, %v2036
    %v2097 = vpack.c.b16 %v2039, %v2037
    %v2098 = vpack.c.b16 %v2042, %v2040
    %v2099 = vpack.c.b16 %v2043, %v2041
    %v2100 = vpack.c.b16 %v2046, %v2044
    %v2101 = vpack.c.b16 %v2047, %v2045
    %v2102 = vpack.c.b16 %v2050, %v2048
    %v2103 = vpack.c.b16 %v2051, %v2049
    %v2104 = vpack.c.b16 %v2054, %v2052
    %v2105 = vpack.c.b16 %v2055, %v2053
    %v2106 = vpack.c.b16 %v2058, %v2056
    %v2107 = vpack.c.b16 %v2059, %v2057
    %v2108 = vpack.c.b16 %v2062, %v2060
    %v2109 = vpack.c.b16 %v2063, %v2061
    %v2110 = vpack.c.b16 %v2066, %v2064
    %v2111 = vpack.c.b16 %v2067, %v2065
    %v2112 = vpack.c.b16 %v2070, %v2068
    %v2113 = vpack.c.b16 %v2071, %v2069
    %v2114 = vpack.c.b16 %v2074, %v2072
    %v2115 = vpack.c.b16 %v2075, %v2073
    %v2116 = vpack.c.b16 %v2078, %v2076
    %v2117 = vpack.c.b16 %v2079, %v2077
    %v2118 = vpack.c.b16 %v2082, %v2080
    %v2119 = vpack.c.b16 %v2083, %v2081
    %v2120 = vpack.c.b16 %v2086, %v2084
    %v2121 = vpack.c.b16 %v2087, %v2085
    %v2122 = vpack.c.b16 %v2090, %v2088
    %v2123 = vpack.c.b16 %v2091, %v2089
    %2156 = vmatprep.subr.bf16.mxu0 %v2093
    %2157 = vmatpush1.bf16.msra.mxu0 %v2092
    %2158 = vmatprep.subr.bf16.mxu0 %v2095
    %2159 = vmatpush1.bf16.msra.mxu0 %v2094
    %2160 = vmatprep.subr.bf16.mxu0 %v2097
    %2161 = vmatpush1.bf16.msra.mxu0 %v2096
    %2162 = vmatprep.subr.bf16.mxu0 %v2099
    %2163 = vmatpush1.bf16.msra.mxu0 %v2098
    %2164 = vmatprep.subr.bf16.mxu0 %v2101
    %2165 = vmatpush1.bf16.msra.mxu0 %v2100
    %2166 = vmatprep.subr.bf16.mxu0 %v2103
    %2167 = vmatpush1.bf16.msra.mxu0 %v2102
    %2168 = vmatprep.subr.bf16.mxu0 %v2105
    %2169 = vmatpush1.bf16.msra.mxu0 %v2104
    %2170 = vmatprep.subr.bf16.mxu0 %v2107
    %2171 = vmatpush1.bf16.msra.mxu0 %v2106
    %2172 = vmatprep.subr.bf16.mxu0 %v2109
    %2173 = vmatpush1.bf16.msra.mxu0 %v2108
    %2174 = vmatprep.subr.bf16.mxu0 %v2111
    %2175 = vmatpush1.bf16.msra.mxu0 %v2110
    %2176 = vmatprep.subr.bf16.mxu0 %v2113
    %2177 = vmatpush1.bf16.msra.mxu0 %v2112
    %2178 = vmatprep.subr.bf16.mxu0 %v2115
    %2179 = vmatpush1.bf16.msra.mxu0 %v2114
    %2180 = vmatprep.subr.bf16.mxu0 %v2117
    %2181 = vmatpush1.bf16.msra.mxu0 %v2116
    %2182 = vmatprep.subr.bf16.mxu0 %v2119
    %2183 = vmatpush1.bf16.msra.mxu0 %v2118
    %2184 = vmatprep.subr.bf16.mxu0 %v2121
    %2185 = vmatpush1.bf16.msra.mxu0 %v2120
    %2186 = vmatprep.subr.bf16.mxu0 %v2123
    %2187 = vmatpush1.bf16.msra.mxu0 %v2122
    %2188 = vmatprep.mubr.bf16.mxu0 %v1952
    %2189 = vmatmul.mubr.bf16.gmra.mrb[0].mxu0 %v1951
    %v2190 = vpop.f32.mrb[0].mxu0
    %v2191 = vadd.f32 0.0, %v2190
    %v2192 = vpop.f32.mrb[0].mxu0
    %v2193 = vadd.f32 0.0, %v2192
    %v2194 = vpop.f32.mrb[0].mxu0
    %v2195 = vadd.f32 0.0, %v2194
    %v2196 = vpop.f32.mrb[0].mxu0
    %v2197 = vadd.f32 0.0, %v2196
    %2198 = vdwg.mxu0
    %v2199 = vadd.f32 %v1960, %v2191
    %v2200 = vadd.f32 %v1961, %v2193
    %v2201 = vadd.f32 %v1962, %v2195
    %v2202 = vadd.f32 %v1963, %v2197
    %v2203 = vtanh.pop %v2199
    %v2204 = vtanh.pop %v2200
    %v2205 = vtanh.pop %v2201
    %v2206 = vtanh.pop %v2202
    %v2207 = vpack.c.bf16 %v2205, %v2203
    %v2208 = vpack.c.bf16 %v2206, %v2204
    %2209 = vst [vmem:[%s1957] sm:$0xff] %v2207
    %2210 = vst [vmem:[%s1957 + $0x8] sm:$0xff] %v2208
    %s2211 = smul.u32 7, 2
    %s2212 = smul.addr %s2211, 8
    %s2213 = scalar_lea.vmem [#allocation2], %s2212
    %v2214 = vld [vmem:[%s2213] sm:$0xff]
    %v2215 = vld [vmem:[%s2213 + $0x8] sm:$0xff]
    %v2216 = vunpack.c.l.bf16 %v2214
    %v2217 = vunpack.c.l.bf16 %v2215
    %v2218 = vunpack.c.h.bf16 %v2214
    %v2219 = vunpack.c.h.bf16 %v2215
    %v2220 = vld [vmem:[#allocation9] sm:$0xff]
    %v2221 = vld [vmem:[#allocation9 + $0x8] sm:$0xff]
    %v2222 = vld [vmem:[#allocation9 + $0x10] sm:$0xff]
    %v2223 = vld [vmem:[#allocation9 + $0x18] sm:$0xff]
    %v2224 = vld [vmem:[#allocation9 + $0x20] sm:$0xff]
    %v2225 = vld [vmem:[#allocation9 + $0x28] sm:$0xff]
    %v2226 = vld [vmem:[#allocation9 + $0x30] sm:$0xff]
    %v2227 = vld [vmem:[#allocation9 + $0x38] sm:$0xff]
    %v2228 = vld [vmem:[#allocation9 + $0x40] sm:$0xff]
    %v2229 = vld [vmem:[#allocation9 + $0x48] sm:$0xff]
    %v2230 = vld [vmem:[#allocation9 + $0x50] sm:$0xff]
    %v2231 = vld [vmem:[#allocation9 + $0x58] sm:$0xff]
    %v2232 = vld [vmem:[#allocation9 + $0x60] sm:$0xff]
    %v2233 = vld [vmem:[#allocation9 + $0x68] sm:$0xff]
    %v2234 = vld [vmem:[#allocation9 + $0x70] sm:$0xff]
    %v2235 = vld [vmem:[#allocation9 + $0x78] sm:$0xff]
    %v2236 = vld [vmem:[#allocation9 + $0x80] sm:$0xff]
    %v2237 = vld [vmem:[#allocation9 + $0x88] sm:$0xff]
    %v2238 = vld [vmem:[#allocation9 + $0x90] sm:$0xff]
    %v2239 = vld [vmem:[#allocation9 + $0x98] sm:$0xff]
    %v2240 = vld [vmem:[#allocation9 + $0xa0] sm:$0xff]
    %v2241 = vld [vmem:[#allocation9 + $0xa8] sm:$0xff]
    %v2242 = vld [vmem:[#allocation9 + $0xb0] sm:$0xff]
    %v2243 = vld [vmem:[#allocation9 + $0xb8] sm:$0xff]
    %v2244 = vld [vmem:[#allocation9 + $0xc0] sm:$0xff]
    %v2245 = vld [vmem:[#allocation9 + $0xc8] sm:$0xff]
    %v2246 = vld [vmem:[#allocation9 + $0xd0] sm:$0xff]
    %v2247 = vld [vmem:[#allocation9 + $0xd8] sm:$0xff]
    %v2248 = vld [vmem:[#allocation9 + $0xe0] sm:$0xff]
    %v2249 = vld [vmem:[#allocation9 + $0xe8] sm:$0xff]
    %v2250 = vld [vmem:[#allocation9 + $0xf0] sm:$0xff]
    %v2251 = vld [vmem:[#allocation9 + $0xf8] sm:$0xff]
    %v2284 = vunpack.c.l.b16 %v2220
    %v2285 = vunpack.c.h.b16 %v2220
    %v2286 = vunpack.c.l.b16 %v2221
    %v2287 = vunpack.c.h.b16 %v2221
    %v2288 = vunpack.c.l.b16 %v2222
    %v2289 = vunpack.c.h.b16 %v2222
    %v2290 = vunpack.c.l.b16 %v2223
    %v2291 = vunpack.c.h.b16 %v2223
    %v2292 = vunpack.c.l.b16 %v2224
    %v2293 = vunpack.c.h.b16 %v2224
    %v2294 = vunpack.c.l.b16 %v2225
    %v2295 = vunpack.c.h.b16 %v2225
    %v2296 = vunpack.c.l.b16 %v2226
    %v2297 = vunpack.c.h.b16 %v2226
    %v2298 = vunpack.c.l.b16 %v2227
    %v2299 = vunpack.c.h.b16 %v2227
    %v2300 = vunpack.c.l.b16 %v2228
    %v2301 = vunpack.c.h.b16 %v2228
    %v2302 = vunpack.c.l.b16 %v2229
    %v2303 = vunpack.c.h.b16 %v2229
    %v2304 = vunpack.c.l.b16 %v2230
    %v2305 = vunpack.c.h.b16 %v2230
    %v2306 = vunpack.c.l.b16 %v2231
    %v2307 = vunpack.c.h.b16 %v2231
    %v2308 = vunpack.c.l.b16 %v2232
    %v2309 = vunpack.c.h.b16 %v2232
    %v2310 = vunpack.c.l.b16 %v2233
    %v2311 = vunpack.c.h.b16 %v2233
    %v2312 = vunpack.c.l.b16 %v2234
    %v2313 = vunpack.c.h.b16 %v2234
    %v2314 = vunpack.c.l.b16 %v2235
    %v2315 = vunpack.c.h.b16 %v2235
    %v2316 = vunpack.c.l.b16 %v2236
    %v2317 = vunpack.c.h.b16 %v2236
    %v2318 = vunpack.c.l.b16 %v2237
    %v2319 = vunpack.c.h.b16 %v2237
    %v2320 = vunpack.c.l.b16 %v2238
    %v2321 = vunpack.c.h.b16 %v2238
    %v2322 = vunpack.c.l.b16 %v2239
    %v2323 = vunpack.c.h.b16 %v2239
    %v2324 = vunpack.c.l.b16 %v2240
    %v2325 = vunpack.c.h.b16 %v2240
    %v2326 = vunpack.c.l.b16 %v2241
    %v2327 = vunpack.c.h.b16 %v2241
    %v2328 = vunpack.c.l.b16 %v2242
    %v2329 = vunpack.c.h.b16 %v2242
    %v2330 = vunpack.c.l.b16 %v2243
    %v2331 = vunpack.c.h.b16 %v2243
    %v2332 = vunpack.c.l.b16 %v2244
    %v2333 = vunpack.c.h.b16 %v2244
    %v2334 = vunpack.c.l.b16 %v2245
    %v2335 = vunpack.c.h.b16 %v2245
    %v2336 = vunpack.c.l.b16 %v2246
    %v2337 = vunpack.c.h.b16 %v2246
    %v2338 = vunpack.c.l.b16 %v2247
    %v2339 = vunpack.c.h.b16 %v2247
    %v2340 = vunpack.c.l.b16 %v2248
    %v2341 = vunpack.c.h.b16 %v2248
    %v2342 = vunpack.c.l.b16 %v2249
    %v2343 = vunpack.c.h.b16 %v2249
    %v2344 = vunpack.c.l.b16 %v2250
    %v2345 = vunpack.c.h.b16 %v2250
    %v2346 = vunpack.c.l.b16 %v2251
    %v2347 = vunpack.c.h.b16 %v2251
    %v2348 = vpack.c.b16 %v2286, %v2284
    %v2349 = vpack.c.b16 %v2287, %v2285
    %v2350 = vpack.c.b16 %v2290, %v2288
    %v2351 = vpack.c.b16 %v2291, %v2289
    %v2352 = vpack.c.b16 %v2294, %v2292
    %v2353 = vpack.c.b16 %v2295, %v2293
    %v2354 = vpack.c.b16 %v2298, %v2296
    %v2355 = vpack.c.b16 %v2299, %v2297
    %v2356 = vpack.c.b16 %v2302, %v2300
    %v2357 = vpack.c.b16 %v2303, %v2301
    %v2358 = vpack.c.b16 %v2306, %v2304
    %v2359 = vpack.c.b16 %v2307, %v2305
    %v2360 = vpack.c.b16 %v2310, %v2308
    %v2361 = vpack.c.b16 %v2311, %v2309
    %v2362 = vpack.c.b16 %v2314, %v2312
    %v2363 = vpack.c.b16 %v2315, %v2313
    %v2364 = vpack.c.b16 %v2318, %v2316
    %v2365 = vpack.c.b16 %v2319, %v2317
    %v2366 = vpack.c.b16 %v2322, %v2320
    %v2367 = vpack.c.b16 %v2323, %v2321
    %v2368 = vpack.c.b16 %v2326, %v2324
    %v2369 = vpack.c.b16 %v2327, %v2325
    %v2370 = vpack.c.b16 %v2330, %v2328
    %v2371 = vpack.c.b16 %v2331, %v2329
    %v2372 = vpack.c.b16 %v2334, %v2332
    %v2373 = vpack.c.b16 %v2335, %v2333
    %v2374 = vpack.c.b16 %v2338, %v2336
    %v2375 = vpack.c.b16 %v2339, %v2337
    %v2376 = vpack.c.b16 %v2342, %v2340
    %v2377 = vpack.c.b16 %v2343, %v2341
    %v2378 = vpack.c.b16 %v2346, %v2344
    %v2379 = vpack.c.b16 %v2347, %v2345
    %2412 = vmatprep.subr.bf16.mxu0 %v2349
    %2413 = vmatpush1.bf16.msra.mxu0 %v2348
    %2414 = vmatprep.subr.bf16.mxu0 %v2351
    %2415 = vmatpush1.bf16.msra.mxu0 %v2350
    %2416 = vmatprep.subr.bf16.mxu0 %v2353
    %2417 = vmatpush1.bf16.msra.mxu0 %v2352
    %2418 = vmatprep.subr.bf16.mxu0 %v2355
    %2419 = vmatpush1.bf16.msra.mxu0 %v2354
    %2420 = vmatprep.subr.bf16.mxu0 %v2357
    %2421 = vmatpush1.bf16.msra.mxu0 %v2356
    %2422 = vmatprep.subr.bf16.mxu0 %v2359
    %2423 = vmatpush1.bf16.msra.mxu0 %v2358
    %2424 = vmatprep.subr.bf16.mxu0 %v2361
    %2425 = vmatpush1.bf16.msra.mxu0 %v2360
    %2426 = vmatprep.subr.bf16.mxu0 %v2363
    %2427 = vmatpush1.bf16.msra.mxu0 %v2362
    %2428 = vmatprep.subr.bf16.mxu0 %v2365
    %2429 = vmatpush1.bf16.msra.mxu0 %v2364
    %2430 = vmatprep.subr.bf16.mxu0 %v2367
    %2431 = vmatpush1.bf16.msra.mxu0 %v2366
    %2432 = vmatprep.subr.bf16.mxu0 %v2369
    %2433 = vmatpush1.bf16.msra.mxu0 %v2368
    %2434 = vmatprep.subr.bf16.mxu0 %v2371
    %2435 = vmatpush1.bf16.msra.mxu0 %v2370
    %2436 = vmatprep.subr.bf16.mxu0 %v2373
    %2437 = vmatpush1.bf16.msra.mxu0 %v2372
    %2438 = vmatprep.subr.bf16.mxu0 %v2375
    %2439 = vmatpush1.bf16.msra.mxu0 %v2374
    %2440 = vmatprep.subr.bf16.mxu0 %v2377
    %2441 = vmatpush1.bf16.msra.mxu0 %v2376
    %2442 = vmatprep.subr.bf16.mxu0 %v2379
    %2443 = vmatpush1.bf16.msra.mxu0 %v2378
    %2444 = vmatprep.mubr.bf16.mxu0 %v2208
    %2445 = vmatmul.mubr.bf16.gmra.mrb[0].mxu0 %v2207
    %v2446 = vpop.f32.mrb[0].mxu0
    %v2447 = vadd.f32 0.0, %v2446
    %v2448 = vpop.f32.mrb[0].mxu0
    %v2449 = vadd.f32 0.0, %v2448
    %v2450 = vpop.f32.mrb[0].mxu0
    %v2451 = vadd.f32 0.0, %v2450
    %v2452 = vpop.f32.mrb[0].mxu0
    %v2453 = vadd.f32 0.0, %v2452
    %2454 = vdwg.mxu0
    %v2455 = vadd.f32 %v2216, %v2447
    %v2456 = vadd.f32 %v2217, %v2449
    %v2457 = vadd.f32 %v2218, %v2451
    %v2458 = vadd.f32 %v2219, %v2453
    %v2459 = vtanh.pop %v2455
    %v2460 = vtanh.pop %v2456
    %v2461 = vtanh.pop %v2457
    %v2462 = vtanh.pop %v2458
    %v2463 = vpack.c.bf16 %v2461, %v2459
    %v2464 = vpack.c.bf16 %v2462, %v2460
    %2465 = vst [vmem:[%s2213] sm:$0xff] %v2463
    %2466 = vst [vmem:[%s2213 + $0x8] sm:$0xff] %v2464
    %v2467 = vld [vmem:[#allocation2] sm:$0xff]
    %v2468 = vld [vmem:[#allocation2 + $0x8] sm:$0xff]
    %v2469 = vld [vmem:[#allocation2 + $0x10] sm:$0xff]
    %v2470 = vld [vmem:[#allocation2 + $0x18] sm:$0xff]
    %v2471 = vld [vmem:[#allocation2 + $0x20] sm:$0xff]
    %v2472 = vld [vmem:[#allocation2 + $0x28] sm:$0xff]
    %v2473 = vld [vmem:[#allocation2 + $0x30] sm:$0xff]
    %v2474 = vld [vmem:[#allocation2 + $0x38] sm:$0xff]
    %v2475 = vld [vmem:[#allocation2 + $0x40] sm:$0xff]
    %v2476 = vld [vmem:[#allocation2 + $0x48] sm:$0xff]
    %v2477 = vld [vmem:[#allocation2 + $0x50] sm:$0xff]
    %v2478 = vld [vmem:[#allocation2 + $0x58] sm:$0xff]
    %v2479 = vld [vmem:[#allocation2 + $0x60] sm:$0xff]
    %v2480 = vld [vmem:[#allocation2 + $0x68] sm:$0xff]
    %v2481 = vld [vmem:[#allocation2 + $0x70] sm:$0xff]
    %v2482 = vld [vmem:[#allocation2 + $0x78] sm:$0xff]
    %v2483 = vld [vmem:[#allocation11] sm:$0xf]
    %v2484 = vld [vmem:[#allocation11 + $0x4] sm:$0xf]
    %v2485 = vld [vmem:[#allocation11 + $0x8] sm:$0xf]
    %v2486 = vld [vmem:[#allocation11 + $0xc] sm:$0xf]
    %v2487 = vld [vmem:[#allocation11 + $0x10] sm:$0xf]
    %v2488 = vld [vmem:[#allocation11 + $0x14] sm:$0xf]
    %v2489 = vld [vmem:[#allocation11 + $0x18] sm:$0xf]
    %v2490 = vld [vmem:[#allocation11 + $0x1c] sm:$0xf]
    %v2491 = vld [vmem:[#allocation11 + $0x20] sm:$0xf]
    %v2492 = vld [vmem:[#allocation11 + $0x24] sm:$0xf]
    %v2493 = vld [vmem:[#allocation11 + $0x28] sm:$0xf]
    %v2494 = vld [vmem:[#allocation11 + $0x2c] sm:$0xf]
    %v2495 = vld [vmem:[#allocation11 + $0x30] sm:$0xf]
    %v2496 = vld [vmem:[#allocation11 + $0x34] sm:$0xf]
    %v2497 = vld [vmem:[#allocation11 + $0x38] sm:$0xf]
    %v2498 = vld [vmem:[#allocation11 + $0x3c] sm:$0xf]
    %v2499 = vld [vmem:[#allocation11 + $0x40] sm:$0xf]
    %v2500 = vld [vmem:[#allocation11 + $0x44] sm:$0xf]
    %v2501 = vld [vmem:[#allocation11 + $0x48] sm:$0xf]
    %v2502 = vld [vmem:[#allocation11 + $0x4c] sm:$0xf]
    %v2503 = vld [vmem:[#allocation11 + $0x50] sm:$0xf]
    %v2504 = vld [vmem:[#allocation11 + $0x54] sm:$0xf]
    %v2505 = vld [vmem:[#allocation11 + $0x58] sm:$0xf]
    %v2506 = vld [vmem:[#allocation11 + $0x5c] sm:$0xf]
    %v2507 = vld [vmem:[#allocation11 + $0x60] sm:$0xf]
    %v2508 = vld [vmem:[#allocation11 + $0x64] sm:$0xf]
    %v2509 = vld [vmem:[#allocation11 + $0x68] sm:$0xf]
    %v2510 = vld [vmem:[#allocation11 + $0x6c] sm:$0xf]
    %v2511 = vld [vmem:[#allocation11 + $0x70] sm:$0xf]
    %v2512 = vld [vmem:[#allocation11 + $0x74] sm:$0xf]
    %v2513 = vld [vmem:[#allocation11 + $0x78] sm:$0xf]
    %v2514 = vld [vmem:[#allocation11 + $0x7c] sm:$0xf]
    %v2515 = vld [vmem:[%s6] sm:$0x1]
    %v2517 = vlaneseq
    %v2518 = vshrl.u32 %v2517, 7
    %v2519 = vsub.s32 0, %v2518
    %v2520 = vrot.slane %v2515, %v2519
    %v2554 = vunpack.c.l.b16 %v2483
    %v2555 = vunpack.c.l.b16 %v2484
    %v2556 = vunpack.c.l.b16 %v2485
    %v2557 = vunpack.c.l.b16 %v2486
    %v2558 = vunpack.c.l.b16 %v2487
    %v2559 = vunpack.c.l.b16 %v2488
    %v2560 = vunpack.c.l.b16 %v2489
    %v2561 = vunpack.c.l.b16 %v2490
    %v2562 = vunpack.c.l.b16 %v2491
    %v2563 = vunpack.c.l.b16 %v2492
    %v2564 = vunpack.c.l.b16 %v2493
    %v2565 = vunpack.c.l.b16 %v2494
    %v2566 = vunpack.c.l.b16 %v2495
    %v2567 = vunpack.c.l.b16 %v2496
    %v2568 = vunpack.c.l.b16 %v2497
    %v2569 = vunpack.c.l.b16 %v2498
    %v2570 = vunpack.c.l.b16 %v2499
    %v2571 = vunpack.c.l.b16 %v2500
    %v2572 = vunpack.c.l.b16 %v2501
    %v2573 = vunpack.c.l.b16 %v2502
    %v2574 = vunpack.c.l.b16 %v2503
    %v2575 = vunpack.c.l.b16 %v2504
    %v2576 = vunpack.c.l.b16 %v2505
    %v2577 = vunpack.c.l.b16 %v2506
    %v2578 = vunpack.c.l.b16 %v2507
    %v2579 = vunpack.c.l.b16 %v2508
    %v2580 = vunpack.c.l.b16 %v2509
    %v2581 = vunpack.c.l.b16 %v2510
    %v2582 = vunpack.c.l.b16 %v2511
    %v2583 = vunpack.c.l.b16 %v2512
    %v2584 = vunpack.c.l.b16 %v2513
    %v2585 = vunpack.c.l.b16 %v2514
    %v2586 = vpack.c.b16 %v2555, %v2554
    %v2587 = vpack.c.b16 %v2557, %v2556
    %v2588 = vpack.c.b16 %v2559, %v2558
    %v2589 = vpack.c.b16 %v2561, %v2560
    %v2590 = vpack.c.b16 %v2563, %v2562
    %v2591 = vpack.c.b16 %v2565, %v2564
    %v2592 = vpack.c.b16 %v2567, %v2566
    %v2593 = vpack.c.b16 %v2569, %v2568
    %v2594 = vpack.c.b16 %v2571, %v2570
    %v2595 = vpack.c.b16 %v2573, %v2572
    %v2596 = vpack.c.b16 %v2575, %v2574
    %v2597 = vpack.c.b16 %v2577, %v2576
    %v2598 = vpack.c.b16 %v2579, %v2578
    %v2599 = vpack.c.b16 %v2581, %v2580
    %v2600 = vpack.c.b16 %v2583, %v2582
    %v2601 = vpack.c.b16 %v2585, %v2584
    %2618 = vmatprep.subr.bf16.mxu0 0
    %2619 = vmatpush1.bf16.msra.mxu0 %v2586
    %2620 = vmatprep.subr.bf16.mxu0 0
    %2621 = vmatpush1.bf16.msra.mxu0 %v2587
    %2622 = vmatprep.subr.bf16.mxu0 0
    %2623 = vmatpush1.bf16.msra.mxu0 %v2588
    %2624 = vmatprep.subr.bf16.mxu0 0
    %2625 = vmatpush1.bf16.msra.mxu0 %v2589
    %2626 = vmatprep.subr.bf16.mxu0 0
    %2627 = vmatpush1.bf16.msra.mxu0 %v2590
    %2628 = vmatprep.subr.bf16.mxu0 0
    %2629 = vmatpush1.bf16.msra.mxu0 %v2591
    %2630 = vmatprep.subr.bf16.mxu0 0
    %2631 = vmatpush1.bf16.msra.mxu0 %v2592
    %2632 = vmatprep.subr.bf16.mxu0 0
    %2633 = vmatpush1.bf16.msra.mxu0 %v2593
    %2634 = vmatprep.subr.bf16.mxu0 0
    %2635 = vmatpush1.bf16.msra.mxu0 %v2594
    %2636 = vmatprep.subr.bf16.mxu0 0
    %2637 = vmatpush1.bf16.msra.mxu0 %v2595
    %2638 = vmatprep.subr.bf16.mxu0 0
    %2639 = vmatpush1.bf16.msra.mxu0 %v2596
    %2640 = vmatprep.subr.bf16.mxu0 0
    %2641 = vmatpush1.bf16.msra.mxu0 %v2597
    %2642 = vmatprep.subr.bf16.mxu0 0
    %2643 = vmatpush1.bf16.msra.mxu0 %v2598
    %2644 = vmatprep.subr.bf16.mxu0 0
    %2645 = vmatpush1.bf16.msra.mxu0 %v2599
    %2646 = vmatprep.subr.bf16.mxu0 0
    %2647 = vmatpush1.bf16.msra.mxu0 %v2600
    %2648 = vmatprep.subr.bf16.mxu0 0
    %2649 = vmatpush1.bf16.msra.mxu0 %v2601
    %2650 = vmatprep.mubr.bf16.mxu0 %v2468
    %2651 = vmatmul.mubr.bf16.gmra.mrb[0].mxu0 %v2467
    %v2652 = vpop.f32.mrb[0].mxu0
    %v2653 = vadd.f32 %v2520, %v2652
    %v2654 = vpop.f32.mrb[0].mxu0
    %v2655 = vpop.f32.mrb[0].mxu0
    %v2656 = vadd.f32 %v2520, %v2655
    %v2657 = vpop.f32.mrb[0].mxu0
    %2658 = vmatprep.mubr.bf16.mxu0 %v2470
    %2659 = vmatmul.mubr.bf16.gmra.mrb[0].mxu0 %v2469
    %v2660 = vpop.f32.mrb[0].mxu0
    %v2661 = vadd.f32 %v2520, %v2660
    %v2662 = vpop.f32.mrb[0].mxu0
    %v2663 = vpop.f32.mrb[0].mxu0
    %v2664 = vadd.f32 %v2520, %v2663
    %v2665 = vpop.f32.mrb[0].mxu0
    %2666 = vmatprep.mubr.bf16.mxu0 %v2472
    %2667 = vmatmul.mubr.bf16.gmra.mrb[0].mxu0 %v2471
    %v2668 = vpop.f32.mrb[0].mxu0
    %v2669 = vadd.f32 %v2520, %v2668
    %v2670 = vpop.f32.mrb[0].mxu0
    %v2671 = vpop.f32.mrb[0].mxu0
    %v2672 = vadd.f32 %v2520, %v2671
    %v2673 = vpop.f32.mrb[0].mxu0
    %2674 = vmatprep.mubr.bf16.mxu0 %v2474
    %2675 = vmatmul.mubr.bf16.gmra.mrb[0].mxu0 %v2473
    %v2676 = vpop.f32.mrb[0].mxu0
    %v2677 = vadd.f32 %v2520, %v2676
    %v2678 = vpop.f32.mrb[0].mxu0
    %v2679 = vpop.f32.mrb[0].mxu0
    %v2680 = vadd.f32 %v2520, %v2679
    %v2681 = vpop.f32.mrb[0].mxu0
    %2682 = vmatprep.mubr.bf16.mxu0 %v2476
    %2683 = vmatmul.mubr.bf16.gmra.mrb[0].mxu0 %v2475
    %v2684 = vpop.f32.mrb[0].mxu0
    %v2685 = vadd.f32 %v2520, %v2684
    %v2686 = vpop.f32.mrb[0].mxu0
    %v2687 = vpop.f32.mrb[0].mxu0
    %v2688 = vadd.f32 %v2520, %v2687
    %v2689 = vpop.f32.mrb[0].mxu0
    %2690 = vmatprep.mubr.bf16.mxu0 %v2478
    %2691 = vmatmul.mubr.bf16.gmra.mrb[0].mxu0 %v2477
    %v2692 = vpop.f32.mrb[0].mxu0
    %v2693 = vadd.f32 %v2520, %v2692
    %v2694 = vpop.f32.mrb[0].mxu0
    %v2695 = vpop.f32.mrb[0].mxu0
    %v2696 = vadd.f32 %v2520, %v2695
    %v2697 = vpop.f32.mrb[0].mxu0
    %2698 = vmatprep.mubr.bf16.mxu0 %v2480
    %2699 = vmatmul.mubr.bf16.gmra.mrb[0].mxu0 %v2479
    %v2700 = vpop.f32.mrb[0].mxu0
    %v2701 = vadd.f32 %v2520, %v2700
    %v2702 = vpop.f32.mrb[0].mxu0
    %v2703 = vpop.f32.mrb[0].mxu0
    %v2704 = vadd.f32 %v2520, %v2703
    %v2705 = vpop.f32.mrb[0].mxu0
    %2706 = vmatprep.mubr.bf16.mxu0 %v2482
    %2707 = vmatmul.mubr.bf16.gmra.mrb[0].mxu0 %v2481
    %v2708 = vpop.f32.mrb[0].mxu0
    %v2709 = vadd.f32 %v2520, %v2708
    %v2710 = vpop.f32.mrb[0].mxu0
    %v2711 = vpop.f32.mrb[0].mxu0
    %v2712 = vadd.f32 %v2520, %v2711
    %v2713 = vpop.f32.mrb[0].mxu0
    %2714 = vdwg.mxu0
    %2715 = vst [vmem:[#allocation12] sm:$0xff] %v2653
    %2716 = vst [vmem:[#allocation12 + $0x8] sm:$0xff] %v2656
    %2717 = vst [vmem:[#allocation12 + $0x10] sm:$0xff] %v2661
    %2718 = vst [vmem:[#allocation12 + $0x18] sm:$0xff] %v2664
    %2719 = vst [vmem:[#allocation12 + $0x20] sm:$0xff] %v2669
    %2720 = vst [vmem:[#allocation12 + $0x28] sm:$0xff] %v2672
    %2721 = vst [vmem:[#allocation12 + $0x30] sm:$0xff] %v2677
    %2722 = vst [vmem:[#allocation12 + $0x38] sm:$0xff] %v2680
    %2723 = vst [vmem:[#allocation12 + $0x40] sm:$0xff] %v2685
    %2724 = vst [vmem:[#allocation12 + $0x48] sm:$0xff] %v2688
    %2725 = vst [vmem:[#allocation12 + $0x50] sm:$0xff] %v2693
    %2726 = vst [vmem:[#allocation12 + $0x58] sm:$0xff] %v2696
    %2727 = vst [vmem:[#allocation12 + $0x60] sm:$0xff] %v2701
    %2728 = vst [vmem:[#allocation12 + $0x68] sm:$0xff] %v2704
    %2729 = vst [vmem:[#allocation12 + $0x70] sm:$0xff] %v2709
    %2730 = vst [vmem:[#allocation12 + $0x78] sm:$0xff] %v2712
    // Predicated region
    $region50: #{tpu_custom_call.1} parent=1 // pred_check
      _
    $region51: #{tpu_custom_call.1} parent=1 // pred_check_branch
      %2732 = sbr.rel (0) target = $region53
    $region52: #{tpu_custom_call.1} parent=1 // pred_region
      %s2734 = ssub.s32 2048, 2048
      %2735 = vsyncadd [#allocation5], %s2734
      %s2736 = sshll.u32 [#allocation12], 4
      %s2737 = int_to_ptr.vmem [resolvable:$true] %s2736
      %2742 = dma.vmem_to_hbm [thread:$0]  %s2737, 2048, %s7, [#allocation5], 128, 128, 8
    $region53: #{tpu_custom_call.1} parent=1 // pred_fallthru
      _
    // Predicated region
    $region54: #{tpu_custom_call.1} parent=1 // pred_check
      _
    $region55: #{tpu_custom_call.1} parent=1 // pred_check_branch
      %2744 = sbr.rel (0) target = $region57
    $region56: #{tpu_custom_call.1} parent=1 // pred_region
      %2745 = dma.done [#allocation5], 2048
    $region57: #{tpu_custom_call.1} parent=1 // pred_fallthru
      _
    %2746 = vsyncpa [#allocation4], 1
    %2747 = vsyncpa [#allocation7], 1
    %2748 = vsyncpa [#allocation10], 1
    %2749 = vsyncpa [#allocation5], 1

</llo_original>
